<compile_context>
chip_gen: v6e
topology: v6e:2x2x1
jax: 0.10.0
libtpu: 0.0.40
codegen_flags: <defaults>
</compile_context>

<pallas_src>
import functools

import jax
import jax.numpy as jnp
from jax.experimental import pallas as pl
from jax.experimental.pallas import tpu as pltpu


def _round_up(x, m):
    return ((x + m - 1) // m) * m


# ----------------------------------------------------------------------------
# Fused kernel: student fwd (labeled+unlabeled), teacher fwd, SelfTraining loss
#   targets_ref : SMEM int32 [BLP]           hard labels (padded)
#   x_ref       : VMEM bf16  [BP, D]         rows [0:BLP)=labeled, [BLP:BP)=unlabeled
#   *w/b refs   : VMEM, weights bf16 (padded to HP/KP lanes), biases f32
#   logits_ref  : VMEM f32   [BP, KP]        student logits (lane-dense store)
#   loss/lx/lu  : SMEM f32   (1,1)           scalars
# ----------------------------------------------------------------------------
def _fused_selftrain_kernel(
        targets_ref, x_ref,
        sw1_ref, sb1_ref, sw2_ref, sb2_ref,
        tw1_ref, tb1_ref, tw2_ref, tb2_ref,
        logits_ref, loss_ref, lx_ref, lu_ref,
        *, T, lambda_u, bl, bu, blp, bup, k):
    inv_T = 1.0 / T
    kp = logits_ref.shape[1]
    x = x_ref[...]                                          # bf16 [BP, D]

    # ---- student forward on the full fused batch (bf16 MXU, f32 accumulate) --
    feat = jnp.dot(x, sw1_ref[...], preferred_element_type=jnp.float32)
    feat = jnp.maximum(feat + sb1_ref[...], 0.0).astype(jnp.bfloat16)
    s_logits = jnp.dot(feat, sw2_ref[...], preferred_element_type=jnp.float32)
    s_logits = s_logits + sb2_ref[...]                      # f32 [BP, KP]
    logits_ref[...] = s_logits                              # lane-dense store

    # ---- teacher forward (no-grad branch); full batch, unlabeled rows used ---
    tfeat = jnp.dot(x, tw1_ref[...], preferred_element_type=jnp.float32)
    tfeat = jnp.maximum(tfeat + tb1_ref[...], 0.0).astype(jnp.bfloat16)
    t_logits = jnp.dot(tfeat, tw2_ref[...], preferred_element_type=jnp.float32)
    t_logits = t_logits + tb2_ref[...]                      # f32 [BP, KP]
    t_logits_u = t_logits[blp:blp + bup, :]                 # [BUP, KP]

    # ---- Lx: hard-label cross entropy over the labeled rows ------------------
    lx = s_logits[:blp, :]                                  # [BLP, KP]
    col_x = jax.lax.broadcasted_iota(jnp.int32, (blp, kp), 1)
    cmask_x = col_x < k                                     # real-class lanes
    mx = jnp.max(jnp.where(cmask_x, lx, -1e30), axis=-1, keepdims=True)
    zx = lx - mx
    ex = jnp.where(cmask_x, jnp.exp(zx), 0.0)
    lse_x = jnp.log(jnp.sum(ex, axis=-1, keepdims=True))
    log_pred_x = zx - lse_x

    row_x = jax.lax.broadcasted_iota(jnp.int32, (blp, kp), 0)
    onehot = jnp.zeros((blp, kp), jnp.float32)
    for i in range(bl):                                     # tiny static loop
        t_i = targets_ref[i]                                # SMEM scalar read
        onehot = onehot + jnp.where((row_x == i) & (col_x == t_i), 1.0, 0.0)
    Lx_raw = -jnp.sum(onehot * log_pred_x) * (1.0 / bl)     # nll mean
    Lx = (1.0 - lambda_u) * Lx_raw

    # ---- pseudo labels: softmax(teacher logits / T) --------------------------
    col_u = jax.lax.broadcasted_iota(jnp.int32, (bup, kp), 1)
    cmask_u = col_u < k
    tl = t_logits_u * inv_T
    mt = jnp.max(jnp.where(cmask_u, tl, -1e30), axis=-1, keepdims=True)
    et = jnp.where(cmask_u, jnp.exp(tl - mt), 0.0)
    pseudo = et * pl.reciprocal(jnp.sum(et, axis=-1, keepdims=True), approx=True)

    # ---- Lu: soft-label CE on student logits / T, mean over unlabeled batch --
    lu = s_logits[blp:blp + bup, :] * inv_T
    mu = jnp.max(jnp.where(cmask_u, lu, -1e30), axis=-1, keepdims=True)
    zu = lu - mu
    eu = jnp.where(cmask_u, jnp.exp(zu), 0.0)
    lse_u = jnp.log(jnp.sum(eu, axis=-1, keepdims=True))
    # sum(-pseudo * log_softmax(zu)) == lse_u - sum(pseudo * zu)  (sum pseudo = 1)
    nll_u = lse_u - jnp.sum(pseudo * zu, axis=-1, keepdims=True)   # [BUP, 1]

    row_u = jax.lax.broadcasted_iota(jnp.int32, (bup, 1), 0)
    Lu_raw = jnp.sum(jnp.where(row_u < bu, nll_u, 0.0)) * (1.0 / bu)
    Lu = lambda_u * Lu_raw

    loss_ref[0, 0] = Lx + Lu
    lx_ref[0, 0] = Lx
    lu_ref[0, 0] = Lu


# ----------------------------------------------------------------------------
# SelfTraining.forward equivalent (single fused pallas_call)
# ----------------------------------------------------------------------------
def self_training_forward(labeled_data, unlabeled_data, student_params,
                          teacher_params, *, T, lambda_u):
    inputs_x, targets_x = labeled_data
    inputs_u, _ = unlabeled_data
    Bl, Bu = inputs_x.shape[0], inputs_u.shape[0]

    sw1, sb1, sw2, sb2 = student_params
    tw1, tb1, tw2, tb2 = teacher_params
    HID, K = sw2.shape

    BLP = _round_up(Bl, 8)          # sublane-pad labeled block
    BUP = _round_up(Bu, 8)          # sublane-pad unlabeled block
    BP = BLP + BUP
    HP = _round_up(HID, 128)        # lane-pad hidden width
    KP = _round_up(K, 128)          # lane-pad class width (lane-dense logits)

    def flat_pad(img, rows):        # NCHW -> [rows, C*H*W], zero-padded rows
        x2 = img.reshape(img.shape[0], -1).astype(jnp.float32)
        return jnp.pad(x2, ((0, rows - x2.shape[0]), (0, 0)))

    x = jnp.concatenate([flat_pad(inputs_x, BLP), flat_pad(inputs_u, BUP)], 0)
    x = x.astype(jnp.bfloat16)      # amp-style: bf16 matmul inputs

    def pad_params(w1, b1, w2, b2):
        w1p = jnp.pad(w1, ((0, 0), (0, HP - HID))).astype(jnp.bfloat16)
        b1p = jnp.pad(b1, ((0, 0), (0, HP - HID))).astype(jnp.float32)
        w2p = jnp.pad(w2, ((0, HP - HID), (0, KP - K))).astype(jnp.bfloat16)
        b2p = jnp.pad(b2, ((0, 0), (0, KP - K))).astype(jnp.float32)
        return w1p, b1p, w2p, b2p

    sparams = pad_params(sw1, sb1, sw2, sb2)
    tparams = pad_params(tw1, tb1, tw2, tb2)
    targets_pad = jnp.pad(targets_x.astype(jnp.int32), (0, BLP - Bl))

    vmem = pl.BlockSpec(memory_space=pltpu.MemorySpace.VMEM)
    smem = pl.BlockSpec(memory_space=pltpu.MemorySpace.SMEM)
    kernel = functools.partial(
        _fused_selftrain_kernel, T=float(T), lambda_u=float(lambda_u),
        bl=Bl, bu=Bu, blp=BLP, bup=BUP, k=K)
    scalar = jax.ShapeDtypeStruct((1, 1), jnp.float32)

    logits_pad, loss, Lx, Lu = pl.pallas_call(
        kernel,
        out_shape=(jax.ShapeDtypeStruct((BP, KP), jnp.float32),
                   scalar, scalar, scalar),
        in_specs=[smem] + [vmem] * 9,
        out_specs=(vmem, smem, smem, smem),
    )(targets_pad, x, *sparams, *tparams)

    logits_x = logits_pad[:Bl, :K]
    return loss[0, 0], Lx[0, 0], Lu[0, 0], logits_x, targets_x


# ----------------------------------------------------------------------------
# Deterministic setup + run
# ----------------------------------------------------------------------------
def make_linear(key, d_in, d_out):
    kw, kb = jax.random.split(key)
    scale = 1.0 / jnp.sqrt(float(d_in))
    w = jax.random.uniform(kw, (d_in, d_out), jnp.float32, -scale, scale)
    b = jax.random.uniform(kb, (1, d_out), jnp.float32, -scale, scale)
    return w, b


if __name__ == "__main__":
    # args.T, args.lambda_u
    T = 0.5
    lambda_u = 0.7

    Bl, Bu = 2, 4            # labeled / unlabeled batch
    C, Himg, Wimg = 4, 16, 16
    D = C * Himg * Wimg      # 1024
    HID = 32
    K = 10                   # num classes

    key = jax.random.PRNGKey(0)
    k_in_x, k_in_u, k_tgt, k_s1, k_s2, k_t1, k_t2 = jax.random.split(key, 7)

    inputs_x = jax.random.normal(k_in_x, (Bl, C, Himg, Wimg), jnp.float32)
    inputs_u = jax.random.normal(k_in_u, (Bu, C, Himg, Wimg), jnp.float32)
    targets_x = jax.random.randint(k_tgt, (Bl,), 0, K, jnp.int32)

    # student (model + classifier) and teacher (t_model + t_classifier) params
    sw1, sb1 = make_linear(k_s1, D, HID)
    sw2, sb2 = make_linear(k_s2, HID, K)
    tw1, tb1 = make_linear(k_t1, D, HID)
    tw2, tb2 = make_linear(k_t2, HID, K)

    loss, Lx, Lu, logits_x, targets_out = self_training_forward(
        (inputs_x, targets_x), (inputs_u, None),
        (sw1, sb1, sw2, sb2), (tw1, tb1, tw2, tb2),
        T=T, lambda_u=lambda_u)

    jax.block_until_ready((loss, Lx, Lu, logits_x, targets_out))

    # sanity check against pure-JAX f32 reference (kernel matmuls are bf16 ->
    # looser tolerances than the old all-f32 version)
    def ref_forward():
        def fwd(x, w1, b1, w2, b2):
            f = jnp.maximum(x.reshape(x.shape[0], -1) @ w1 + b1, 0.0)
            return f @ w2 + b2
        lx = fwd(inputs_x, sw1, sb1, sw2, sb2)
        lu = fwd(inputs_u, sw1, sb1, sw2, sb2)
        tlu = fwd(inputs_u, tw1, tb1, tw2, tb2)
        lsm_x = jax.nn.log_softmax(lx, -1)
        Lx_r = (1 - lambda_u) * jnp.mean(
            -jnp.take_along_axis(lsm_x, targets_x[:, None], 1)[:, 0])
        pseudo = jax.nn.softmax(tlu / T, -1)
        Lu_r = lambda_u * jnp.mean(
            jnp.sum(-pseudo * jax.nn.log_softmax(lu / T, -1), axis=1))
        return Lx_r + Lu_r, Lx_r, Lu_r, lx

    rloss, rLx, rLu, rlogits = ref_forward()
    assert jnp.allclose(logits_x, rlogits, atol=3e-2), (logits_x, rlogits)
    assert jnp.allclose(loss, rloss, atol=5e-2), (loss, rloss)
    assert jnp.allclose(Lx, rLx, atol=5e-2), (Lx, rLx)
    assert jnp.allclose(Lu, rLu, atol=5e-2), (Lu, rLu)

    print("KERNEL_OK")
</pallas_src>

<mosaic_0001>
module attributes {stable_mosaic.version = 11 : i64} {
  func.func @_fused_selftrain_kernel(%arg0: memref<8xi32, #tpu.memory_space<smem>>, %arg1: memref<16x1024xbf16, #tpu.memory_space<vmem>>, %arg2: memref<1024x128xbf16, #tpu.memory_space<vmem>>, %arg3: memref<1x128xf32, #tpu.memory_space<vmem>>, %arg4: memref<128x128xbf16, #tpu.memory_space<vmem>>, %arg5: memref<1x128xf32, #tpu.memory_space<vmem>>, %arg6: memref<1024x128xbf16, #tpu.memory_space<vmem>>, %arg7: memref<1x128xf32, #tpu.memory_space<vmem>>, %arg8: memref<128x128xbf16, #tpu.memory_space<vmem>>, %arg9: memref<1x128xf32, #tpu.memory_space<vmem>>, %arg10: memref<16x128xf32, #tpu.memory_space<vmem>>, %arg11: memref<1x1xf32, #tpu.memory_space<smem>>, %arg12: memref<1x1xf32, #tpu.memory_space<smem>>, %arg13: memref<1x1xf32, #tpu.memory_space<smem>>) attributes {dimension_semantics = [], scalar_prefetch = 0 : i64, scratch_operands = 0 : i64, tpu.core_type = #tpu.core_type<tc>} {
    %c0 = arith.constant 0 : index
    %c0_0 = arith.constant 0 : index
    %0 = vector.load %arg1[%c0, %c0_0] : memref<16x1024xbf16, #tpu.memory_space<vmem>>, vector<16x1024xbf16>
    %c0_1 = arith.constant 0 : index
    %c0_2 = arith.constant 0 : index
    %1 = vector.load %arg2[%c0_1, %c0_2] : memref<1024x128xbf16, #tpu.memory_space<vmem>>, vector<1024x128xbf16>
    %cst = arith.constant dense<0.000000e+00> : vector<16x128xf32>
    %2 = tpu.matmul %0, %1, %cst {dimension_numbers = #tpu.dot_dimension_numbers<[1], [0], [0], [1], [0, 0, 1, 1], [], []>} : vector<16x1024xbf16>, vector<1024x128xbf16>, vector<16x128xf32> -> vector<16x128xf32>
    %c0_3 = arith.constant 0 : index
    %c0_4 = arith.constant 0 : index
    %3 = vector.load %arg3[%c0_3, %c0_4] : memref<1x128xf32, #tpu.memory_space<vmem>>, vector<1x128xf32>
    %4 = vector.broadcast %3 : vector<1x128xf32> to vector<16x128xf32>
    %5 = arith.addf %2, %4 : vector<16x128xf32>
    %cst_5 = arith.constant 0.000000e+00 : f32
    %6 = vector.broadcast %cst_5 : f32 to vector<16x128xf32>
    %7 = arith.maximumf %5, %6 : vector<16x128xf32>
    %8 = arith.truncf %7 : vector<16x128xf32> to vector<16x128xbf16>
    %c0_6 = arith.constant 0 : index
    %c0_7 = arith.constant 0 : index
    %9 = vector.load %arg4[%c0_6, %c0_7] : memref<128x128xbf16, #tpu.memory_space<vmem>>, vector<128x128xbf16>
    %cst_8 = arith.constant dense<0.000000e+00> : vector<16x128xf32>
    %10 = tpu.matmul %8, %9, %cst_8 {dimension_numbers = #tpu.dot_dimension_numbers<[1], [0], [0], [1], [0, 0, 1, 1], [], []>} : vector<16x128xbf16>, vector<128x128xbf16>, vector<16x128xf32> -> vector<16x128xf32>
    %c0_9 = arith.constant 0 : index
    %c0_10 = arith.constant 0 : index
    %11 = vector.load %arg5[%c0_9, %c0_10] : memref<1x128xf32, #tpu.memory_space<vmem>>, vector<1x128xf32>
    %12 = vector.broadcast %11 : vector<1x128xf32> to vector<16x128xf32>
    %13 = arith.addf %10, %12 : vector<16x128xf32>
    %c0_11 = arith.constant 0 : index
    %c0_12 = arith.constant 0 : index
    %14 = vector.load %arg10[%c0_11, %c0_12] : memref<16x128xf32, #tpu.memory_space<vmem>>, vector<16x128xf32>
    tpu.vector_store %arg10[%c0_11, %c0_12], %13 {strides = array<i32>} : memref<16x128xf32, #tpu.memory_space<vmem>>, vector<16x128xf32>,
    %c0_13 = arith.constant 0 : index
    %c0_14 = arith.constant 0 : index
    %15 = vector.load %arg6[%c0_13, %c0_14] : memref<1024x128xbf16, #tpu.memory_space<vmem>>, vector<1024x128xbf16>
    %cst_15 = arith.constant dense<0.000000e+00> : vector<16x128xf32>
    %16 = tpu.matmul %0, %15, %cst_15 {dimension_numbers = #tpu.dot_dimension_numbers<[1], [0], [0], [1], [0, 0, 1, 1], [], []>} : vector<16x1024xbf16>, vector<1024x128xbf16>, vector<16x128xf32> -> vector<16x128xf32>
    %c0_16 = arith.constant 0 : index
    %c0_17 = arith.constant 0 : index
    %17 = vector.load %arg7[%c0_16, %c0_17] : memref<1x128xf32, #tpu.memory_space<vmem>>, vector<1x128xf32>
    %18 = vector.broadcast %17 : vector<1x128xf32> to vector<16x128xf32>
    %19 = arith.addf %16, %18 : vector<16x128xf32>
    %cst_18 = arith.constant 0.000000e+00 : f32
    %20 = vector.broadcast %cst_18 : f32 to vector<16x128xf32>
    %21 = arith.maximumf %19, %20 : vector<16x128xf32>
    %22 = arith.truncf %21 : vector<16x128xf32> to vector<16x128xbf16>
    %c0_19 = arith.constant 0 : index
    %c0_20 = arith.constant 0 : index
    %23 = vector.load %arg8[%c0_19, %c0_20] : memref<128x128xbf16, #tpu.memory_space<vmem>>, vector<128x128xbf16>
    %cst_21 = arith.constant dense<0.000000e+00> : vector<16x128xf32>
    %24 = tpu.matmul %22, %23, %cst_21 {dimension_numbers = #tpu.dot_dimension_numbers<[1], [0], [0], [1], [0, 0, 1, 1], [], []>} : vector<16x128xbf16>, vector<128x128xbf16>, vector<16x128xf32> -> vector<16x128xf32>
    %c0_22 = arith.constant 0 : index
    %c0_23 = arith.constant 0 : index
    %25 = vector.load %arg9[%c0_22, %c0_23] : memref<1x128xf32, #tpu.memory_space<vmem>>, vector<1x128xf32>
    %26 = vector.broadcast %25 : vector<1x128xf32> to vector<16x128xf32>
    %27 = arith.addf %24, %26 : vector<16x128xf32>
    %28 = vector.extract_strided_slice %27 {offsets = [8, 0], sizes = [8, 128], strides = [1, 1]} : vector<16x128xf32> to vector<8x128xf32>
    %29 = vector.extract_strided_slice %13 {offsets = [0, 0], sizes = [8, 128], strides = [1, 1]} : vector<16x128xf32> to vector<8x128xf32>
    %30 = tpu.iota {dimensions = array<i32: 1>} : vector<8x128xi32>
    %c10_i32 = arith.constant 10 : i32
    %31 = vector.broadcast %c10_i32 : i32 to vector<8x128xi32>
    %32 = arith.cmpi slt, %30, %31 : vector<8x128xi32>
    %cst_24 = arith.constant -1.000000e+30 : f32
    %33 = vector.broadcast %cst_24 : f32 to vector<8x128xf32>
    %34 = arith.select %32, %29, %33 : vector<8x128xi1>, vector<8x128xf32>
    %cst_25 = arith.constant dense<0xFF800000> : vector<8xf32>
    %35 = vector.multi_reduction <maximumf>, %34, %cst_25 [1] : vector<8x128xf32> to vector<8xf32>
    %36 = vector.shape_cast %35 : vector<8xf32> to vector<8x1xf32>
    %37 = vector.broadcast %36 : vector<8x1xf32> to vector<8x128xf32>
    %38 = arith.subf %29, %37 : vector<8x128xf32>
    %39 = math.exp %38 : vector<8x128xf32>
    %cst_26 = arith.constant 0.000000e+00 : f32
    %40 = vector.broadcast %cst_26 : f32 to vector<8x128xf32>
    %41 = arith.select %32, %39, %40 : vector<8x128xi1>, vector<8x128xf32>
    %cst_27 = arith.constant dense<0.000000e+00> : vector<8xf32>
    %42 = vector.multi_reduction <add>, %41, %cst_27 [1] : vector<8x128xf32> to vector<8xf32>
    %43 = vector.shape_cast %42 : vector<8xf32> to vector<8x1xf32>
    %44 = math.log %43 : vector<8x1xf32>
    %45 = vector.broadcast %44 : vector<8x1xf32> to vector<8x128xf32>
    %46 = arith.subf %38, %45 : vector<8x128xf32>
    %47 = tpu.iota {dimensions = array<i32: 0>} : vector<8x128xi32>
    %cst_28 = arith.constant 0.000000e+00 : f32
    %48 = vector.broadcast %cst_28 : f32 to vector<8x128xf32>
    %c0_29 = arith.constant 0 : index
    %49 = memref.load %arg0[%c0_29] : memref<8xi32, #tpu.memory_space<smem>>
    %c0_i32 = arith.constant 0 : i32
    %50 = vector.broadcast %c0_i32 : i32 to vector<8x128xi32>
    %51 = arith.cmpi eq, %47, %50 : vector<8x128xi32>
    %52 = vector.broadcast %49 : i32 to vector<8x128xi32>
    %53 = arith.cmpi eq, %30, %52 : vector<8x128xi32>
    %54 = arith.andi %51, %53 : vector<8x128xi1>
    %cst_30 = arith.constant 1.000000e+00 : f32
    %cst_31 = arith.constant 0.000000e+00 : f32
    %55 = vector.broadcast %cst_30 : f32 to vector<8x128xf32>
    %56 = vector.broadcast %cst_31 : f32 to vector<8x128xf32>
    %57 = arith.select %54, %55, %56 : vector<8x128xi1>, vector<8x128xf32>
    %58 = arith.addf %48, %57 : vector<8x128xf32>
    %c1 = arith.constant 1 : index
    %59 = memref.load %arg0[%c1] : memref<8xi32, #tpu.memory_space<smem>>
    %c1_i32 = arith.constant 1 : i32
    %60 = vector.broadcast %c1_i32 : i32 to vector<8x128xi32>
    %61 = arith.cmpi eq, %47, %60 : vector<8x128xi32>
    %62 = vector.broadcast %59 : i32 to vector<8x128xi32>
    %63 = arith.cmpi eq, %30, %62 : vector<8x128xi32>
    %64 = arith.andi %61, %63 : vector<8x128xi1>
    %cst_32 = arith.constant 1.000000e+00 : f32
    %cst_33 = arith.constant 0.000000e+00 : f32
    %65 = vector.broadcast %cst_32 : f32 to vector<8x128xf32>
    %66 = vector.broadcast %cst_33 : f32 to vector<8x128xf32>
    %67 = arith.select %64, %65, %66 : vector<8x128xi1>, vector<8x128xf32>
    %68 = arith.addf %58, %67 : vector<8x128xf32>
    %69 = arith.mulf %68, %46 : vector<8x128xf32>
    %70 = vector.shape_cast %69 : vector<8x128xf32> to vector<1x8x128xf32>
    %cst_34 = arith.constant dense<0.000000e+00> : vector<1xf32>
    %71 = vector.multi_reduction <add>, %70, %cst_34 [1, 2] : vector<1x8x128xf32> to vector<1xf32>
    %72 = vector.shape_cast %71 : vector<1xf32> to vector<1x1x1xf32>
    %73 = vector.extract %72[0, 0, 0] : f32 from vector<1x1x1xf32>
    %cst_35 = arith.constant 0.000000e+00 : f32
    %74 = arith.subf %cst_35, %73 : f32
    %cst_36 = arith.constant 5.000000e-01 : f32
    %75 = arith.mulf %74, %cst_36 : f32
    %cst_37 = arith.constant 3.000000e-01 : f32
    %76 = arith.mulf %cst_37, %75 : f32
    %77 = tpu.iota {dimensions = array<i32: 1>} : vector<8x128xi32>
    %c10_i32_38 = arith.constant 10 : i32
    %78 = vector.broadcast %c10_i32_38 : i32 to vector<8x128xi32>
    %79 = arith.cmpi slt, %77, %78 : vector<8x128xi32>
    %cst_39 = arith.constant 2.000000e+00 : f32
    %80 = vector.broadcast %cst_39 : f32 to vector<8x128xf32>
    %81 = arith.mulf %28, %80 : vector<8x128xf32>
    %cst_40 = arith.constant -1.000000e+30 : f32
    %82 = vector.broadcast %cst_40 : f32 to vector<8x128xf32>
    %83 = arith.select %79, %81, %82 : vector<8x128xi1>, vector<8x128xf32>
    %cst_41 = arith.constant dense<0xFF800000> : vector<8xf32>
    %84 = vector.multi_reduction <maximumf>, %83, %cst_41 [1] : vector<8x128xf32> to vector<8xf32>
    %85 = vector.shape_cast %84 : vector<8xf32> to vector<8x1xf32>
    %86 = vector.broadcast %85 : vector<8x1xf32> to vector<8x128xf32>
    %87 = arith.subf %81, %86 : vector<8x128xf32>
    %88 = math.exp %87 : vector<8x128xf32>
    %cst_42 = arith.constant 0.000000e+00 : f32
    %89 = vector.broadcast %cst_42 : f32 to vector<8x128xf32>
    %90 = arith.select %79, %88, %89 : vector<8x128xi1>, vector<8x128xf32>
    %cst_43 = arith.constant dense<0.000000e+00> : vector<8xf32>
    %91 = vector.multi_reduction <add>, %90, %cst_43 [1] : vector<8x128xf32> to vector<8xf32>
    %92 = vector.shape_cast %91 : vector<8xf32> to vector<8x1xf32>
    %93 = tpu.reciprocal %92 {approx = true} : vector<8x1xf32> -> vector<8x1xf32>
    %94 = vector.broadcast %93 : vector<8x1xf32> to vector<8x128xf32>
    %95 = arith.mulf %90, %94 : vector<8x128xf32>
    %96 = vector.extract_strided_slice %13 {offsets = [8, 0], sizes = [8, 128], strides = [1, 1]} : vector<16x128xf32> to vector<8x128xf32>
    %cst_44 = arith.constant 2.000000e+00 : f32
    %97 = vector.broadcast %cst_44 : f32 to vector<8x128xf32>
    %98 = arith.mulf %96, %97 : vector<8x128xf32>
    %cst_45 = arith.constant -1.000000e+30 : f32
    %99 = vector.broadcast %cst_45 : f32 to vector<8x128xf32>
    %100 = arith.select %79, %98, %99 : vector<8x128xi1>, vector<8x128xf32>
    %cst_46 = arith.constant dense<0xFF800000> : vector<8xf32>
    %101 = vector.multi_reduction <maximumf>, %100, %cst_46 [1] : vector<8x128xf32> to vector<8xf32>
    %102 = vector.shape_cast %101 : vector<8xf32> to vector<8x1xf32>
    %103 = vector.broadcast %102 : vector<8x1xf32> to vector<8x128xf32>
    %104 = arith.subf %98, %103 : vector<8x128xf32>
    %105 = math.exp %104 : vector<8x128xf32>
    %cst_47 = arith.constant 0.000000e+00 : f32
    %106 = vector.broadcast %cst_47 : f32 to vector<8x128xf32>
    %107 = arith.select %79, %105, %106 : vector<8x128xi1>, vector<8x128xf32>
    %cst_48 = arith.constant dense<0.000000e+00> : vector<8xf32>
    %108 = vector.multi_reduction <add>, %107, %cst_48 [1] : vector<8x128xf32> to vector<8xf32>
    %109 = vector.shape_cast %108 : vector<8xf32> to vector<8x1xf32>
    %110 = math.log %109 : vector<8x1xf32>
    %111 = arith.mulf %95, %104 : vector<8x128xf32>
    %cst_49 = arith.constant dense<0.000000e+00> : vector<8xf32>
    %112 = vector.multi_reduction <add>, %111, %cst_49 [1] : vector<8x128xf32> to vector<8xf32>
    %113 = vector.shape_cast %112 : vector<8xf32> to vector<8x1xf32>
    %114 = arith.subf %110, %113 : vector<8x1xf32>
    %115 = tpu.iota {dimensions = array<i32: 0>} : vector<8x1xi32>
    %c4_i32 = arith.constant 4 : i32
    %116 = vector.broadcast %c4_i32 : i32 to vector<8x1xi32>
    %117 = arith.cmpi slt, %115, %116 : vector<8x1xi32>
    %cst_50 = arith.constant 0.000000e+00 : f32
    %118 = vector.broadcast %cst_50 : f32 to vector<8x1xf32>
    %119 = arith.select %117, %114, %118 : vector<8x1xi1>, vector<8x1xf32>
    %120 = vector.shape_cast %119 : vector<8x1xf32> to vector<1x8x1xf32>
    %cst_51 = arith.constant dense<0.000000e+00> : vector<1xf32>
    %121 = vector.multi_reduction <add>, %120, %cst_51 [1, 2] : vector<1x8x1xf32> to vector<1xf32>
    %122 = vector.shape_cast %121 : vector<1xf32> to vector<1x1x1xf32>
    %123 = vector.extract %122[0, 0, 0] : f32 from vector<1x1x1xf32>
    %cst_52 = arith.constant 2.500000e-01 : f32
    %124 = arith.mulf %123, %cst_52 : f32
    %cst_53 = arith.constant 0.699999988 : f32
    %125 = arith.mulf %cst_53, %124 : f32
    %126 = arith.addf %76, %125 : f32
    %c0_54 = arith.constant 0 : index
    %c0_55 = arith.constant 0 : index
    %127 = memref.load %arg11[%c0_54, %c0_55] : memref<1x1xf32, #tpu.memory_space<smem>>
    memref.store %126, %arg11[%c0_54, %c0_55] : memref<1x1xf32, #tpu.memory_space<smem>>
    %c0_56 = arith.constant 0 : index
    %c0_57 = arith.constant 0 : index
    %128 = memref.load %arg12[%c0_56, %c0_57] : memref<1x1xf32, #tpu.memory_space<smem>>
    memref.store %76, %arg12[%c0_56, %c0_57] : memref<1x1xf32, #tpu.memory_space<smem>>
    %c0_58 = arith.constant 0 : index
    %c0_59 = arith.constant 0 : index
    %129 = memref.load %arg13[%c0_58, %c0_59] : memref<1x1xf32, #tpu.memory_space<smem>>
    memref.store %125, %arg13[%c0_58, %c0_59] : memref<1x1xf32, #tpu.memory_space<smem>>
    return
  }
}

</mosaic_0001>

<llo_original>
// kernel: tpu_custom_call.1
$region0: #{tpu_custom_call.1}
  #allocation0 [shape = 'u32[]', space=smem, size = 0x4, offset = 0x4, fixed_abs, tag = 'smem constant byte address 0x4 - core index']
  #allocation1 [shape = 'u32[144,128]{1,0:T(1,128)}', space=vmem, size = 0x12000, scoped, tag = 'internal scratch']
  %s0 = inlined_call_operand.hbm [shape: s32[8], index: 0, kind: input, shape index: {}]
  %s1 = inlined_call_operand.hbm [shape: bf16[16,1024], index: 1, kind: input, shape index: {}]
  %s2 = inlined_call_operand.hbm [shape: bf16[1024,128], index: 2, kind: input, shape index: {}]
  %s3 = inlined_call_operand.vmem [shape: f32[1,128], index: 3, kind: input, shape index: {}]
  %s4 = inlined_call_operand.hbm [shape: bf16[128,128], index: 4, kind: input, shape index: {}]
  %s5 = inlined_call_operand.vmem [shape: f32[1,128], index: 5, kind: input, shape index: {}]
  %s6 = inlined_call_operand.hbm [shape: bf16[1024,128], index: 6, kind: input, shape index: {}]
  %s7 = inlined_call_operand.vmem [shape: f32[1,128], index: 7, kind: input, shape index: {}]
  %s8 = inlined_call_operand.hbm [shape: bf16[128,128], index: 8, kind: input, shape index: {}]
  %s9 = inlined_call_operand.vmem [shape: f32[1,128], index: 9, kind: input, shape index: {}]
  %s10 = inlined_call_operand.hbm [shape: f32[16,128], index: 10, kind: output, shape index: {0}]
  %s11 = inlined_call_operand.hbm [shape: f32[1,1], index: 11, kind: output, shape index: {1}]
  %s12 = inlined_call_operand.hbm [shape: f32[1,1], index: 12, kind: output, shape index: {2}]
  %s13 = inlined_call_operand.hbm [shape: f32[1,1], index: 13, kind: output, shape index: {3}]
  %14 = xla_tuple %s10, %s11, %s12, %s13
  %s15 = sld [smem:[#allocation0]]
  $region98: #{tpu_custom_call.1} parent=0
    _
  %s17 = ssub.s32 1, %s15
  %s18 = scalar_select 0, %s17, %s15
  $region1: #{tpu_custom_call.1} parent=0
    #allocation2 [shape = 'u8[512]{0}', space=smem, size = 0x200, scoped, tag = 'input window, operand 0, single buffered']
    #allocation3 [shape = 's32[1]{0}', space=sflag, size = 0x4, scoped, tag = 'scoped memory for tpu_custom_call.1']
    #allocation4 [shape = 's32[1]{0}', space=sflag, size = 0x4, scoped, tag = 'scoped memory for tpu_custom_call.1']
    #allocation5 [shape = 's32[1]{0}', space=sflag, size = 0x4, scoped, tag = 'scoped memory for tpu_custom_call.1']
    #allocation6 [shape = 's32[1]{0}', space=sflag, size = 0x4, scoped, tag = 'scoped memory for tpu_custom_call.1']
    #allocation7 [shape = 'u8[32768]{0}', space=vmem, size = 0x8000, scoped, tag = 'input window, operand 1, single buffered']
    #allocation8 [shape = 'u8[262144]{0}', space=vmem, size = 0x40000, scoped, tag = 'input window, operand 2, single buffered']
    #allocation9 [shape = 's32[1]{0}', space=sflag, size = 0x4, scoped, tag = 'scoped memory for tpu_custom_call.1']
    #allocation10 [shape = 'u8[32768]{0}', space=vmem, size = 0x8000, scoped, tag = 'input window, operand 4, single buffered']
    #allocation11 [shape = 'u8[262144]{0}', space=vmem, size = 0x40000, scoped, tag = 'input window, operand 6, single buffered']
    #allocation12 [shape = 's32[1]{0}', space=sflag, size = 0x4, scoped, tag = 'scoped memory for tpu_custom_call.1']
    #allocation13 [shape = 'u8[32768]{0}', space=vmem, size = 0x8000, scoped, tag = 'input window, operand 8, single buffered']
    #allocation14 [shape = 'u8[8192]{0}', space=vmem, size = 0x2000, scoped, tag = 'output window, operand 0, single buffered']
    #allocation15 [shape = 'u8[512]{0}', space=smem, size = 0x200, scoped, tag = 'output window, operand 1, single buffered']
    #allocation16 [shape = 'u8[512]{0}', space=smem, size = 0x200, scoped, tag = 'output window, operand 2, single buffered']
    #allocation17 [shape = 's32[1]{0}', space=sflag, size = 0x4, scoped, tag = 'scoped memory for tpu_custom_call.1']
    #allocation18 [shape = 'u8[512]{0}', space=smem, size = 0x200, scoped, tag = 'output window, operand 3, single buffered']
    %19 = vsyncpa [#allocation5], 0
    %20 = vsyncpa [#allocation3], 0
    %21 = vsyncpa [#allocation9], 0
    %22 = vsyncpa [#allocation12], 0
    %23 = vsyncpa [#allocation4], 0
    %24 = vsyncpa [#allocation6], 0
    %25 = vsyncpa [#allocation17], 0
    // Predicated region
    $region2: #{tpu_custom_call.1} parent=1 // pred_check
      _
    $region3: #{tpu_custom_call.1} parent=1 // pred_check_branch
      %27 = sbr.rel (0) target = $region5
    $region4: #{tpu_custom_call.1} parent=1 // pred_region
      %s29 = ssub.s32 16, 16
      %30 = vsyncadd [#allocation5], %s29
      %33 = dma.hbm_to_smem %s0, 16, [#allocation2], [#allocation5]
    $region5: #{tpu_custom_call.1} parent=1 // pred_fallthru
      _
    // Predicated region
    $region6: #{tpu_custom_call.1} parent=1 // pred_check
      _
    $region7: #{tpu_custom_call.1} parent=1 // pred_check_branch
      %35 = sbr.rel (0) target = $region9
    $region8: #{tpu_custom_call.1} parent=1 // pred_region
      %s37 = ssub.s32 1024, 1024
      %38 = vsyncadd [#allocation3], %s37
      %s39 = sshll.u32 [#allocation7], 4
      %s40 = int_to_ptr.vmem [resolvable:$true] %s39
      %45 = dma.hbm_to_vmem [thread:$0]  %s1, 1024, %s40, [#allocation3], 512, 512, 32
    $region9: #{tpu_custom_call.1} parent=1 // pred_fallthru
      _
    // Predicated region
    $region10: #{tpu_custom_call.1} parent=1 // pred_check
      _
    $region11: #{tpu_custom_call.1} parent=1 // pred_check_branch
      %47 = sbr.rel (0) target = $region13
    $region12: #{tpu_custom_call.1} parent=1 // pred_region
      %s49 = ssub.s32 8192, 8192
      %50 = vsyncadd [#allocation9], %s49
      %s51 = sshll.u32 [#allocation8], 4
      %s52 = int_to_ptr.vmem [resolvable:$true] %s51
      %57 = dma.hbm_to_vmem [thread:$0]  %s2, 8192, %s52, [#allocation9], 64, 64, 4
    $region13: #{tpu_custom_call.1} parent=1 // pred_fallthru
      _
    // Predicated region
    $region14: #{tpu_custom_call.1} parent=1 // pred_check
      _
    $region15: #{tpu_custom_call.1} parent=1 // pred_check_branch
      %59 = sbr.rel (0) target = $region17
    $region16: #{tpu_custom_call.1} parent=1 // pred_region
      _
    $region17: #{tpu_custom_call.1} parent=1 // pred_fallthru
      _
    // Predicated region
    $region18: #{tpu_custom_call.1} parent=1 // pred_check
      _
    $region19: #{tpu_custom_call.1} parent=1 // pred_check_branch
      %61 = sbr.rel (0) target = $region21
    $region20: #{tpu_custom_call.1} parent=1 // pred_region
      %s63 = ssub.s32 1024, 1024
      %64 = vsyncadd [#allocation9], %s63
      %s65 = sshll.u32 [#allocation10], 4
      %s66 = int_to_ptr.vmem [resolvable:$true] %s65
      %71 = dma.hbm_to_vmem [thread:$0]  %s4, 1024, %s66, [#allocation9], 64, 64, 4
    $region21: #{tpu_custom_call.1} parent=1 // pred_fallthru
      _
    // Predicated region
    $region22: #{tpu_custom_call.1} parent=1 // pred_check
      _
    $region23: #{tpu_custom_call.1} parent=1 // pred_check_branch
      %73 = sbr.rel (0) target = $region25
    $region24: #{tpu_custom_call.1} parent=1 // pred_region
      _
    $region25: #{tpu_custom_call.1} parent=1 // pred_fallthru
      _
    // Predicated region
    $region26: #{tpu_custom_call.1} parent=1 // pred_check
      _
    $region27: #{tpu_custom_call.1} parent=1 // pred_check_branch
      %75 = sbr.rel (0) target = $region29
    $region28: #{tpu_custom_call.1} parent=1 // pred_region
      %s77 = ssub.s32 8192, 8192
      %78 = vsyncadd [#allocation12], %s77
      %s79 = sshll.u32 [#allocation11], 4
      %s80 = int_to_ptr.vmem [resolvable:$true] %s79
      %85 = dma.hbm_to_vmem [thread:$0]  %s6, 8192, %s80, [#allocation12], 64, 64, 4
    $region29: #{tpu_custom_call.1} parent=1 // pred_fallthru
      _
    // Predicated region
    $region30: #{tpu_custom_call.1} parent=1 // pred_check
      _
    $region31: #{tpu_custom_call.1} parent=1 // pred_check_branch
      %87 = sbr.rel (0) target = $region33
    $region32: #{tpu_custom_call.1} parent=1 // pred_region
      _
    $region33: #{tpu_custom_call.1} parent=1 // pred_fallthru
      _
    // Predicated region
    $region34: #{tpu_custom_call.1} parent=1 // pred_check
      _
    $region35: #{tpu_custom_call.1} parent=1 // pred_check_branch
      %89 = sbr.rel (0) target = $region37
    $region36: #{tpu_custom_call.1} parent=1 // pred_region
      %s91 = ssub.s32 1024, 1024
      %92 = vsyncadd [#allocation12], %s91
      %s93 = sshll.u32 [#allocation13], 4
      %s94 = int_to_ptr.vmem [resolvable:$true] %s93
      %99 = dma.hbm_to_vmem [thread:$0]  %s8, 1024, %s94, [#allocation12], 64, 64, 4
    $region37: #{tpu_custom_call.1} parent=1 // pred_fallthru
      _
    // Predicated region
    $region38: #{tpu_custom_call.1} parent=1 // pred_check
      _
    $region39: #{tpu_custom_call.1} parent=1 // pred_check_branch
      %101 = sbr.rel (0) target = $region41
    $region40: #{tpu_custom_call.1} parent=1 // pred_region
      _
    $region41: #{tpu_custom_call.1} parent=1 // pred_fallthru
      _
    // Predicated region
    $region42: #{tpu_custom_call.1} parent=1 // pred_check
      _
    $region43: #{tpu_custom_call.1} parent=1 // pred_check_branch
      %103 = sbr.rel (0) target = $region45
    $region44: #{tpu_custom_call.1} parent=1 // pred_region
      %104 = dma.done [#allocation5], 16
    $region45: #{tpu_custom_call.1} parent=1 // pred_fallthru
      _
    // Predicated region
    $region46: #{tpu_custom_call.1} parent=1 // pred_check
      _
    $region47: #{tpu_custom_call.1} parent=1 // pred_check_branch
      %106 = sbr.rel (0) target = $region49
    $region48: #{tpu_custom_call.1} parent=1 // pred_region
      %107 = dma.done [#allocation3], 1024
    $region49: #{tpu_custom_call.1} parent=1 // pred_fallthru
      _
    // Predicated region
    $region50: #{tpu_custom_call.1} parent=1 // pred_check
      _
    $region51: #{tpu_custom_call.1} parent=1 // pred_check_branch
      %109 = sbr.rel (0) target = $region53
    $region52: #{tpu_custom_call.1} parent=1 // pred_region
      %110 = dma.done [#allocation9], 8192
    $region53: #{tpu_custom_call.1} parent=1 // pred_fallthru
      _
    // Predicated region
    $region54: #{tpu_custom_call.1} parent=1 // pred_check
      _
    $region55: #{tpu_custom_call.1} parent=1 // pred_check_branch
      %112 = sbr.rel (0) target = $region57
    $region56: #{tpu_custom_call.1} parent=1 // pred_region
      %113 = dma.done [#allocation9], 1024
    $region57: #{tpu_custom_call.1} parent=1 // pred_fallthru
      _
    // Predicated region
    $region58: #{tpu_custom_call.1} parent=1 // pred_check
      _
    $region59: #{tpu_custom_call.1} parent=1 // pred_check_branch
      %115 = sbr.rel (0) target = $region61
    $region60: #{tpu_custom_call.1} parent=1 // pred_region
      %116 = dma.done [#allocation12], 8192
    $region61: #{tpu_custom_call.1} parent=1 // pred_fallthru
      _
    // Predicated region
    $region62: #{tpu_custom_call.1} parent=1 // pred_check
      _
    $region63: #{tpu_custom_call.1} parent=1 // pred_check_branch
      %118 = sbr.rel (0) target = $region65
    $region64: #{tpu_custom_call.1} parent=1 // pred_region
      %119 = dma.done [#allocation12], 1024
    $region65: #{tpu_custom_call.1} parent=1 // pred_fallthru
      _
    %120 = sfence
    %v122 = vld [vmem:[#allocation7] sm:$0xff]
    %v123 = vld [vmem:[#allocation7 + $0x8] sm:$0xff]
    %v124 = vld [vmem:[#allocation7 + $0x10] sm:$0xff]
    %v125 = vld [vmem:[#allocation7 + $0x18] sm:$0xff]
    %v126 = vld [vmem:[#allocation7 + $0x20] sm:$0xff]
    %v127 = vld [vmem:[#allocation7 + $0x28] sm:$0xff]
    %v128 = vld [vmem:[#allocation7 + $0x30] sm:$0xff]
    %v129 = vld [vmem:[#allocation7 + $0x38] sm:$0xff]
    %v130 = vld [vmem:[#allocation8] sm:$0xf]
    %v131 = vld [vmem:[#allocation8 + $0x4] sm:$0xf]
    %v132 = vld [vmem:[#allocation8 + $0x8] sm:$0xf]
    %v133 = vld [vmem:[#allocation8 + $0xc] sm:$0xf]
    %v134 = vld [vmem:[#allocation8 + $0x10] sm:$0xf]
    %v135 = vld [vmem:[#allocation8 + $0x14] sm:$0xf]
    %v136 = vld [vmem:[#allocation8 + $0x18] sm:$0xf]
    %v137 = vld [vmem:[#allocation8 + $0x1c] sm:$0xf]
    %v138 = vld [vmem:[#allocation8 + $0x20] sm:$0xf]
    %v139 = vld [vmem:[#allocation8 + $0x24] sm:$0xf]
    %v140 = vld [vmem:[#allocation8 + $0x28] sm:$0xf]
    %v141 = vld [vmem:[#allocation8 + $0x2c] sm:$0xf]
    %v142 = vld [vmem:[#allocation8 + $0x30] sm:$0xf]
    %v143 = vld [vmem:[#allocation8 + $0x34] sm:$0xf]
    %v144 = vld [vmem:[#allocation8 + $0x38] sm:$0xf]
    %v145 = vld [vmem:[#allocation8 + $0x3c] sm:$0xf]
    %v146 = vld [vmem:[#allocation8 + $0x40] sm:$0xf]
    %v147 = vld [vmem:[#allocation8 + $0x44] sm:$0xf]
    %v148 = vld [vmem:[#allocation8 + $0x48] sm:$0xf]
    %v149 = vld [vmem:[#allocation8 + $0x4c] sm:$0xf]
    %v150 = vld [vmem:[#allocation8 + $0x50] sm:$0xf]
    %v151 = vld [vmem:[#allocation8 + $0x54] sm:$0xf]
    %v152 = vld [vmem:[#allocation8 + $0x58] sm:$0xf]
    %v153 = vld [vmem:[#allocation8 + $0x5c] sm:$0xf]
    %v154 = vld [vmem:[#allocation8 + $0x60] sm:$0xf]
    %v155 = vld [vmem:[#allocation8 + $0x64] sm:$0xf]
    %v156 = vld [vmem:[#allocation8 + $0x68] sm:$0xf]
    %v157 = vld [vmem:[#allocation8 + $0x6c] sm:$0xf]
    %v158 = vld [vmem:[#allocation8 + $0x70] sm:$0xf]
    %v159 = vld [vmem:[#allocation8 + $0x74] sm:$0xf]
    %v160 = vld [vmem:[#allocation8 + $0x78] sm:$0xf]
    %v161 = vld [vmem:[#allocation8 + $0x7c] sm:$0xf]
    %v162 = vld [vmem:[#allocation8 + $0x80] sm:$0xf]
    %v163 = vld [vmem:[#allocation8 + $0x84] sm:$0xf]
    %v164 = vld [vmem:[#allocation8 + $0x88] sm:$0xf]
    %v165 = vld [vmem:[#allocation8 + $0x8c] sm:$0xf]
    %v166 = vld [vmem:[#allocation8 + $0x90] sm:$0xf]
    %v167 = vld [vmem:[#allocation8 + $0x94] sm:$0xf]
    %v168 = vld [vmem:[#allocation8 + $0x98] sm:$0xf]
    %v169 = vld [vmem:[#allocation8 + $0x9c] sm:$0xf]
    %v170 = vld [vmem:[#allocation8 + $0xa0] sm:$0xf]
    %v171 = vld [vmem:[#allocation8 + $0xa4] sm:$0xf]
    %v172 = vld [vmem:[#allocation8 + $0xa8] sm:$0xf]
    %v173 = vld [vmem:[#allocation8 + $0xac] sm:$0xf]
    %v174 = vld [vmem:[#allocation8 + $0xb0] sm:$0xf]
    %v175 = vld [vmem:[#allocation8 + $0xb4] sm:$0xf]
    %v176 = vld [vmem:[#allocation8 + $0xb8] sm:$0xf]
    %v177 = vld [vmem:[#allocation8 + $0xbc] sm:$0xf]
    %v178 = vld [vmem:[#allocation8 + $0xc0] sm:$0xf]
    %v179 = vld [vmem:[#allocation8 + $0xc4] sm:$0xf]
    %v180 = vld [vmem:[#allocation8 + $0xc8] sm:$0xf]
    %v181 = vld [vmem:[#allocation8 + $0xcc] sm:$0xf]
    %v182 = vld [vmem:[#allocation8 + $0xd0] sm:$0xf]
    %v183 = vld [vmem:[#allocation8 + $0xd4] sm:$0xf]
    %v184 = vld [vmem:[#allocation8 + $0xd8] sm:$0xf]
    %v185 = vld [vmem:[#allocation8 + $0xdc] sm:$0xf]
    %v186 = vld [vmem:[#allocation8 + $0xe0] sm:$0xf]
    %v187 = vld [vmem:[#allocation8 + $0xe4] sm:$0xf]
    %v188 = vld [vmem:[#allocation8 + $0xe8] sm:$0xf]
    %v189 = vld [vmem:[#allocation8 + $0xec] sm:$0xf]
    %v190 = vld [vmem:[#allocation8 + $0xf0] sm:$0xf]
    %v191 = vld [vmem:[#allocation8 + $0xf4] sm:$0xf]
    %v192 = vld [vmem:[#allocation8 + $0xf8] sm:$0xf]
    %v193 = vld [vmem:[#allocation8 + $0xfc] sm:$0xf]
    %v194 = vld [vmem:[#allocation8 + $0x100] sm:$0xf]
    %v195 = vld [vmem:[#allocation8 + $0x104] sm:$0xf]
    %v196 = vld [vmem:[#allocation8 + $0x108] sm:$0xf]
    %v197 = vld [vmem:[#allocation8 + $0x10c] sm:$0xf]
    %v198 = vld [vmem:[#allocation8 + $0x110] sm:$0xf]
    %v199 = vld [vmem:[#allocation8 + $0x114] sm:$0xf]
    %v200 = vld [vmem:[#allocation8 + $0x118] sm:$0xf]
    %v201 = vld [vmem:[#allocation8 + $0x11c] sm:$0xf]
    %v202 = vld [vmem:[#allocation8 + $0x120] sm:$0xf]
    %v203 = vld [vmem:[#allocation8 + $0x124] sm:$0xf]
    %v204 = vld [vmem:[#allocation8 + $0x128] sm:$0xf]
    %v205 = vld [vmem:[#allocation8 + $0x12c] sm:$0xf]
    %v206 = vld [vmem:[#allocation8 + $0x130] sm:$0xf]
    %v207 = vld [vmem:[#allocation8 + $0x134] sm:$0xf]
    %v208 = vld [vmem:[#allocation8 + $0x138] sm:$0xf]
    %v209 = vld [vmem:[#allocation8 + $0x13c] sm:$0xf]
    %v210 = vld [vmem:[#allocation8 + $0x140] sm:$0xf]
    %v211 = vld [vmem:[#allocation8 + $0x144] sm:$0xf]
    %v212 = vld [vmem:[#allocation8 + $0x148] sm:$0xf]
    %v213 = vld [vmem:[#allocation8 + $0x14c] sm:$0xf]
    %v214 = vld [vmem:[#allocation8 + $0x150] sm:$0xf]
    %v215 = vld [vmem:[#allocation8 + $0x154] sm:$0xf]
    %v216 = vld [vmem:[#allocation8 + $0x158] sm:$0xf]
    %v217 = vld [vmem:[#allocation8 + $0x15c] sm:$0xf]
    %v218 = vld [vmem:[#allocation8 + $0x160] sm:$0xf]
    %v219 = vld [vmem:[#allocation8 + $0x164] sm:$0xf]
    %v220 = vld [vmem:[#allocation8 + $0x168] sm:$0xf]
    %v221 = vld [vmem:[#allocation8 + $0x16c] sm:$0xf]
    %v222 = vld [vmem:[#allocation8 + $0x170] sm:$0xf]
    %v223 = vld [vmem:[#allocation8 + $0x174] sm:$0xf]
    %v224 = vld [vmem:[#allocation8 + $0x178] sm:$0xf]
    %v225 = vld [vmem:[#allocation8 + $0x17c] sm:$0xf]
    %v226 = vld [vmem:[#allocation8 + $0x180] sm:$0xf]
    %v227 = vld [vmem:[#allocation8 + $0x184] sm:$0xf]
    %v228 = vld [vmem:[#allocation8 + $0x188] sm:$0xf]
    %v229 = vld [vmem:[#allocation8 + $0x18c] sm:$0xf]
    %v230 = vld [vmem:[#allocation8 + $0x190] sm:$0xf]
    %v231 = vld [vmem:[#allocation8 + $0x194] sm:$0xf]
    %v232 = vld [vmem:[#allocation8 + $0x198] sm:$0xf]
    %v233 = vld [vmem:[#allocation8 + $0x19c] sm:$0xf]
    %v234 = vld [vmem:[#allocation8 + $0x1a0] sm:$0xf]
    %v235 = vld [vmem:[#allocation8 + $0x1a4] sm:$0xf]
    %v236 = vld [vmem:[#allocation8 + $0x1a8] sm:$0xf]
    %v237 = vld [vmem:[#allocation8 + $0x1ac] sm:$0xf]
    %v238 = vld [vmem:[#allocation8 + $0x1b0] sm:$0xf]
    %v239 = vld [vmem:[#allocation8 + $0x1b4] sm:$0xf]
    %v240 = vld [vmem:[#allocation8 + $0x1b8] sm:$0xf]
    %v241 = vld [vmem:[#allocation8 + $0x1bc] sm:$0xf]
    %v242 = vld [vmem:[#allocation8 + $0x1c0] sm:$0xf]
    %v243 = vld [vmem:[#allocation8 + $0x1c4] sm:$0xf]
    %v244 = vld [vmem:[#allocation8 + $0x1c8] sm:$0xf]
    %v245 = vld [vmem:[#allocation8 + $0x1cc] sm:$0xf]
    %v246 = vld [vmem:[#allocation8 + $0x1d0] sm:$0xf]
    %v247 = vld [vmem:[#allocation8 + $0x1d4] sm:$0xf]
    %v248 = vld [vmem:[#allocation8 + $0x1d8] sm:$0xf]
    %v249 = vld [vmem:[#allocation8 + $0x1dc] sm:$0xf]
    %v250 = vld [vmem:[#allocation8 + $0x1e0] sm:$0xf]
    %v251 = vld [vmem:[#allocation8 + $0x1e4] sm:$0xf]
    %v252 = vld [vmem:[#allocation8 + $0x1e8] sm:$0xf]
    %v253 = vld [vmem:[#allocation8 + $0x1ec] sm:$0xf]
    %v254 = vld [vmem:[#allocation8 + $0x1f0] sm:$0xf]
    %v255 = vld [vmem:[#allocation8 + $0x1f4] sm:$0xf]
    %v256 = vld [vmem:[#allocation8 + $0x1f8] sm:$0xf]
    %v257 = vld [vmem:[#allocation8 + $0x1fc] sm:$0xf]
    %v258 = vld [vmem:[%s3] sm:$0x1]
    %v260 = vlaneseq
    %v261 = vshrl.u32 %v260, 7
    %v262 = vsub.s32 0, %v261
    %v263 = vrot.slane %v258, %v262
    %v273 = vunpack.c.l.b16 %v122
    %v274 = vunpack.c.h.b16 %v122
    %v275 = vunpack.c.l.b16 %v123
    %v276 = vunpack.c.h.b16 %v123
    %v277 = vunpack.c.l.b16 %v124
    %v278 = vunpack.c.h.b16 %v124
    %v279 = vunpack.c.l.b16 %v125
    %v280 = vunpack.c.h.b16 %v125
    %v281 = vunpack.c.l.b16 %v126
    %v282 = vunpack.c.h.b16 %v126
    %v283 = vunpack.c.l.b16 %v127
    %v284 = vunpack.c.h.b16 %v127
    %v285 = vunpack.c.l.b16 %v128
    %v286 = vunpack.c.h.b16 %v128
    %v287 = vunpack.c.l.b16 %v129
    %v288 = vunpack.c.h.b16 %v129
    %v289 = vpack.c.b16 %v281, %v273
    %v290 = vpack.c.b16 %v282, %v274
    %v291 = vpack.c.b16 %v283, %v275
    %v292 = vpack.c.b16 %v284, %v276
    %v293 = vpack.c.b16 %v285, %v277
    %v294 = vpack.c.b16 %v286, %v278
    %v295 = vpack.c.b16 %v287, %v279
    %v296 = vpack.c.b16 %v288, %v280
    %v433 = vunpack.c.l.b16 %v130
    %v434 = vunpack.c.l.b16 %v131
    %v435 = vunpack.c.l.b16 %v132
    %v436 = vunpack.c.l.b16 %v133
    %v437 = vunpack.c.l.b16 %v134
    %v438 = vunpack.c.l.b16 %v135
    %v439 = vunpack.c.l.b16 %v136
    %v440 = vunpack.c.l.b16 %v137
    %v441 = vunpack.c.l.b16 %v138
    %v442 = vunpack.c.l.b16 %v139
    %v443 = vunpack.c.l.b16 %v140
    %v444 = vunpack.c.l.b16 %v141
    %v445 = vunpack.c.l.b16 %v142
    %v446 = vunpack.c.l.b16 %v143
    %v447 = vunpack.c.l.b16 %v144
    %v448 = vunpack.c.l.b16 %v145
    %v449 = vunpack.c.l.b16 %v146
    %v450 = vunpack.c.l.b16 %v147
    %v451 = vunpack.c.l.b16 %v148
    %v452 = vunpack.c.l.b16 %v149
    %v453 = vunpack.c.l.b16 %v150
    %v454 = vunpack.c.l.b16 %v151
    %v455 = vunpack.c.l.b16 %v152
    %v456 = vunpack.c.l.b16 %v153
    %v457 = vunpack.c.l.b16 %v154
    %v458 = vunpack.c.l.b16 %v155
    %v459 = vunpack.c.l.b16 %v156
    %v460 = vunpack.c.l.b16 %v157
    %v461 = vunpack.c.l.b16 %v158
    %v462 = vunpack.c.l.b16 %v159
    %v463 = vunpack.c.l.b16 %v160
    %v464 = vunpack.c.l.b16 %v161
    %v465 = vunpack.c.l.b16 %v162
    %v466 = vunpack.c.l.b16 %v163
    %v467 = vunpack.c.l.b16 %v164
    %v468 = vunpack.c.l.b16 %v165
    %v469 = vunpack.c.l.b16 %v166
    %v470 = vunpack.c.l.b16 %v167
    %v471 = vunpack.c.l.b16 %v168
    %v472 = vunpack.c.l.b16 %v169
    %v473 = vunpack.c.l.b16 %v170
    %v474 = vunpack.c.l.b16 %v171
    %v475 = vunpack.c.l.b16 %v172
    %v476 = vunpack.c.l.b16 %v173
    %v477 = vunpack.c.l.b16 %v174
    %v478 = vunpack.c.l.b16 %v175
    %v479 = vunpack.c.l.b16 %v176
    %v480 = vunpack.c.l.b16 %v177
    %v481 = vunpack.c.l.b16 %v178
    %v482 = vunpack.c.l.b16 %v179
    %v483 = vunpack.c.l.b16 %v180
    %v484 = vunpack.c.l.b16 %v181
    %v485 = vunpack.c.l.b16 %v182
    %v486 = vunpack.c.l.b16 %v183
    %v487 = vunpack.c.l.b16 %v184
    %v488 = vunpack.c.l.b16 %v185
    %v489 = vunpack.c.l.b16 %v186
    %v490 = vunpack.c.l.b16 %v187
    %v491 = vunpack.c.l.b16 %v188
    %v492 = vunpack.c.l.b16 %v189
    %v493 = vunpack.c.l.b16 %v190
    %v494 = vunpack.c.l.b16 %v191
    %v495 = vunpack.c.l.b16 %v192
    %v496 = vunpack.c.l.b16 %v193
    %v497 = vunpack.c.l.b16 %v194
    %v498 = vunpack.c.l.b16 %v195
    %v499 = vunpack.c.l.b16 %v196
    %v500 = vunpack.c.l.b16 %v197
    %v501 = vunpack.c.l.b16 %v198
    %v502 = vunpack.c.l.b16 %v199
    %v503 = vunpack.c.l.b16 %v200
    %v504 = vunpack.c.l.b16 %v201
    %v505 = vunpack.c.l.b16 %v202
    %v506 = vunpack.c.l.b16 %v203
    %v507 = vunpack.c.l.b16 %v204
    %v508 = vunpack.c.l.b16 %v205
    %v509 = vunpack.c.l.b16 %v206
    %v510 = vunpack.c.l.b16 %v207
    %v511 = vunpack.c.l.b16 %v208
    %v512 = vunpack.c.l.b16 %v209
    %v513 = vunpack.c.l.b16 %v210
    %v514 = vunpack.c.l.b16 %v211
    %v515 = vunpack.c.l.b16 %v212
    %v516 = vunpack.c.l.b16 %v213
    %v517 = vunpack.c.l.b16 %v214
    %v518 = vunpack.c.l.b16 %v215
    %v519 = vunpack.c.l.b16 %v216
    %v520 = vunpack.c.l.b16 %v217
    %v521 = vunpack.c.l.b16 %v218
    %v522 = vunpack.c.l.b16 %v219
    %v523 = vunpack.c.l.b16 %v220
    %v524 = vunpack.c.l.b16 %v221
    %v525 = vunpack.c.l.b16 %v222
    %v526 = vunpack.c.l.b16 %v223
    %v527 = vunpack.c.l.b16 %v224
    %v528 = vunpack.c.l.b16 %v225
    %v529 = vunpack.c.l.b16 %v226
    %v530 = vunpack.c.l.b16 %v227
    %v531 = vunpack.c.l.b16 %v228
    %v532 = vunpack.c.l.b16 %v229
    %v533 = vunpack.c.l.b16 %v230
    %v534 = vunpack.c.l.b16 %v231
    %v535 = vunpack.c.l.b16 %v232
    %v536 = vunpack.c.l.b16 %v233
    %v537 = vunpack.c.l.b16 %v234
    %v538 = vunpack.c.l.b16 %v235
    %v539 = vunpack.c.l.b16 %v236
    %v540 = vunpack.c.l.b16 %v237
    %v541 = vunpack.c.l.b16 %v238
    %v542 = vunpack.c.l.b16 %v239
    %v543 = vunpack.c.l.b16 %v240
    %v544 = vunpack.c.l.b16 %v241
    %v545 = vunpack.c.l.b16 %v242
    %v546 = vunpack.c.l.b16 %v243
    %v547 = vunpack.c.l.b16 %v244
    %v548 = vunpack.c.l.b16 %v245
    %v549 = vunpack.c.l.b16 %v246
    %v550 = vunpack.c.l.b16 %v247
    %v551 = vunpack.c.l.b16 %v248
    %v552 = vunpack.c.l.b16 %v249
    %v553 = vunpack.c.l.b16 %v250
    %v554 = vunpack.c.l.b16 %v251
    %v555 = vunpack.c.l.b16 %v252
    %v556 = vunpack.c.l.b16 %v253
    %v557 = vunpack.c.l.b16 %v254
    %v558 = vunpack.c.l.b16 %v255
    %v559 = vunpack.c.l.b16 %v256
    %v560 = vunpack.c.l.b16 %v257
    %v561 = vpack.c.b16 %v434, %v433
    %v562 = vpack.c.b16 %v436, %v435
    %v563 = vpack.c.b16 %v438, %v437
    %v564 = vpack.c.b16 %v440, %v439
    %v565 = vpack.c.b16 %v442, %v441
    %v566 = vpack.c.b16 %v444, %v443
    %v567 = vpack.c.b16 %v446, %v445
    %v568 = vpack.c.b16 %v448, %v447
    %v569 = vpack.c.b16 %v450, %v449
    %v570 = vpack.c.b16 %v452, %v451
    %v571 = vpack.c.b16 %v454, %v453
    %v572 = vpack.c.b16 %v456, %v455
    %v573 = vpack.c.b16 %v458, %v457
    %v574 = vpack.c.b16 %v460, %v459
    %v575 = vpack.c.b16 %v462, %v461
    %v576 = vpack.c.b16 %v464, %v463
    %v577 = vpack.c.b16 %v466, %v465
    %v578 = vpack.c.b16 %v468, %v467
    %v579 = vpack.c.b16 %v470, %v469
    %v580 = vpack.c.b16 %v472, %v471
    %v581 = vpack.c.b16 %v474, %v473
    %v582 = vpack.c.b16 %v476, %v475
    %v583 = vpack.c.b16 %v478, %v477
    %v584 = vpack.c.b16 %v480, %v479
    %v585 = vpack.c.b16 %v482, %v481
    %v586 = vpack.c.b16 %v484, %v483
    %v587 = vpack.c.b16 %v486, %v485
    %v588 = vpack.c.b16 %v488, %v487
    %v589 = vpack.c.b16 %v490, %v489
    %v590 = vpack.c.b16 %v492, %v491
    %v591 = vpack.c.b16 %v494, %v493
    %v592 = vpack.c.b16 %v496, %v495
    %v593 = vpack.c.b16 %v498, %v497
    %v594 = vpack.c.b16 %v500, %v499
    %v595 = vpack.c.b16 %v502, %v501
    %v596 = vpack.c.b16 %v504, %v503
    %v597 = vpack.c.b16 %v506, %v505
    %v598 = vpack.c.b16 %v508, %v507
    %v599 = vpack.c.b16 %v510, %v509
    %v600 = vpack.c.b16 %v512, %v511
    %v601 = vpack.c.b16 %v514, %v513
    %v602 = vpack.c.b16 %v516, %v515
    %v603 = vpack.c.b16 %v518, %v517
    %v604 = vpack.c.b16 %v520, %v519
    %v605 = vpack.c.b16 %v522, %v521
    %v606 = vpack.c.b16 %v524, %v523
    %v607 = vpack.c.b16 %v526, %v525
    %v608 = vpack.c.b16 %v528, %v527
    %v609 = vpack.c.b16 %v530, %v529
    %v610 = vpack.c.b16 %v532, %v531
    %v611 = vpack.c.b16 %v534, %v533
    %v612 = vpack.c.b16 %v536, %v535
    %v613 = vpack.c.b16 %v538, %v537
    %v614 = vpack.c.b16 %v540, %v539
    %v615 = vpack.c.b16 %v542, %v541
    %v616 = vpack.c.b16 %v544, %v543
    %v617 = vpack.c.b16 %v546, %v545
    %v618 = vpack.c.b16 %v548, %v547
    %v619 = vpack.c.b16 %v550, %v549
    %v620 = vpack.c.b16 %v552, %v551
    %v621 = vpack.c.b16 %v554, %v553
    %v622 = vpack.c.b16 %v556, %v555
    %v623 = vpack.c.b16 %v558, %v557
    %v624 = vpack.c.b16 %v560, %v559
    %689 = vmatprep.subr.bf16.mxu0 0
    %690 = vmatpush1.bf16.msra.mxu0 %v568
    %691 = vmatprep.subr.bf16.mxu0 0
    %692 = vmatpush1.bf16.msra.mxu0 %v567
    %693 = vmatprep.subr.bf16.mxu0 0
    %694 = vmatpush1.bf16.msra.mxu0 %v566
    %695 = vmatprep.subr.bf16.mxu0 0
    %696 = vmatpush1.bf16.msra.mxu0 %v565
    %697 = vmatprep.subr.bf16.mxu0 0
    %698 = vmatpush1.bf16.msra.mxu0 %v564
    %699 = vmatprep.subr.bf16.mxu0 0
    %700 = vmatpush1.bf16.msra.mxu0 %v563
    %701 = vmatprep.subr.bf16.mxu0 0
    %702 = vmatpush1.bf16.msra.mxu0 %v562
    %703 = vmatprep.subr.bf16.mxu0 0
    %704 = vmatpush1.bf16.msra.mxu0 %v561
    %705 = vmatprep.subr.bf16.mxu0 0
    %706 = vmatpush2.bf16.msra.mxu0 %v576
    %707 = vmatprep.subr.bf16.mxu0 0
    %708 = vmatpush2.bf16.msra.mxu0 %v575
    %709 = vmatprep.subr.bf16.mxu0 0
    %710 = vmatpush2.bf16.msra.mxu0 %v574
    %711 = vmatprep.subr.bf16.mxu0 0
    %712 = vmatpush2.bf16.msra.mxu0 %v573
    %713 = vmatprep.subr.bf16.mxu0 0
    %714 = vmatpush2.bf16.msra.mxu0 %v572
    %715 = vmatprep.subr.bf16.mxu0 0
    %716 = vmatpush2.bf16.msra.mxu0 %v571
    %717 = vmatprep.subr.bf16.mxu0 0
    %718 = vmatpush2.bf16.msra.mxu0 %v570
    %719 = vmatprep.subr.bf16.mxu0 0
    %720 = vmatpush2.bf16.msra.mxu0 %v569
    %721 = vmatprep.mubr.bf16.mxu0 %v290
    %722 = vmatmul.mubr.bf16.gmra.mxu0 %v289
    %v723 = vpop.f32.mrf.mxu0
    %v724 = vadd.f32 %v263, %v723
    %v725 = vpop.f32.mrf.mxu0
    %v726 = vpop.f32.mrf.mxu0
    %v727 = vadd.f32 %v263, %v726
    %v728 = vpop.f32.mrf.mxu0
    %729 = vdwg.mxu0
    %730 = vmatprep.subr.bf16.mxu0 0
    %731 = vmatpush1.bf16.msra.mxu0 %v584
    %732 = vmatprep.subr.bf16.mxu0 0
    %733 = vmatpush1.bf16.msra.mxu0 %v583
    %734 = vmatprep.subr.bf16.mxu0 0
    %735 = vmatpush1.bf16.msra.mxu0 %v582
    %736 = vmatprep.subr.bf16.mxu0 0
    %737 = vmatpush1.bf16.msra.mxu0 %v581
    %738 = vmatprep.subr.bf16.mxu0 0
    %739 = vmatpush1.bf16.msra.mxu0 %v580
    %740 = vmatprep.subr.bf16.mxu0 0
    %741 = vmatpush1.bf16.msra.mxu0 %v579
    %742 = vmatprep.subr.bf16.mxu0 0
    %743 = vmatpush1.bf16.msra.mxu0 %v578
    %744 = vmatprep.subr.bf16.mxu0 0
    %745 = vmatpush1.bf16.msra.mxu0 %v577
    %746 = vmatprep.subr.bf16.mxu0 0
    %747 = vmatpush2.bf16.msra.mxu0 %v592
    %748 = vmatprep.subr.bf16.mxu0 0
    %749 = vmatpush2.bf16.msra.mxu0 %v591
    %750 = vmatprep.subr.bf16.mxu0 0
    %751 = vmatpush2.bf16.msra.mxu0 %v590
    %752 = vmatprep.subr.bf16.mxu0 0
    %753 = vmatpush2.bf16.msra.mxu0 %v589
    %754 = vmatprep.subr.bf16.mxu0 0
    %755 = vmatpush2.bf16.msra.mxu0 %v588
    %756 = vmatprep.subr.bf16.mxu0 0
    %757 = vmatpush2.bf16.msra.mxu0 %v587
    %758 = vmatprep.subr.bf16.mxu0 0
    %759 = vmatpush2.bf16.msra.mxu0 %v586
    %760 = vmatprep.subr.bf16.mxu0 0
    %761 = vmatpush2.bf16.msra.mxu0 %v585
    %762 = vmatprep.mubr.bf16.mxu0 %v292
    %763 = vmatmul.mubr.bf16.gmra.mxu0 %v291
    %v764 = vpop.f32.mrf.mxu0
    %v765 = vadd.f32 %v724, %v764
    %v766 = vpop.f32.mrf.mxu0
    %v767 = vpop.f32.mrf.mxu0
    %v768 = vadd.f32 %v727, %v767
    %v769 = vpop.f32.mrf.mxu0
    %770 = vdwg.mxu0
    %771 = vmatprep.subr.bf16.mxu0 0
    %772 = vmatpush1.bf16.msra.mxu0 %v600
    %773 = vmatprep.subr.bf16.mxu0 0
    %774 = vmatpush1.bf16.msra.mxu0 %v599
    %775 = vmatprep.subr.bf16.mxu0 0
    %776 = vmatpush1.bf16.msra.mxu0 %v598
    %777 = vmatprep.subr.bf16.mxu0 0
    %778 = vmatpush1.bf16.msra.mxu0 %v597
    %779 = vmatprep.subr.bf16.mxu0 0
    %780 = vmatpush1.bf16.msra.mxu0 %v596
    %781 = vmatprep.subr.bf16.mxu0 0
    %782 = vmatpush1.bf16.msra.mxu0 %v595
    %783 = vmatprep.subr.bf16.mxu0 0
    %784 = vmatpush1.bf16.msra.mxu0 %v594
    %785 = vmatprep.subr.bf16.mxu0 0
    %786 = vmatpush1.bf16.msra.mxu0 %v593
    %787 = vmatprep.subr.bf16.mxu0 0
    %788 = vmatpush2.bf16.msra.mxu0 %v608
    %789 = vmatprep.subr.bf16.mxu0 0
    %790 = vmatpush2.bf16.msra.mxu0 %v607
    %791 = vmatprep.subr.bf16.mxu0 0
    %792 = vmatpush2.bf16.msra.mxu0 %v606
    %793 = vmatprep.subr.bf16.mxu0 0
    %794 = vmatpush2.bf16.msra.mxu0 %v605
    %795 = vmatprep.subr.bf16.mxu0 0
    %796 = vmatpush2.bf16.msra.mxu0 %v604
    %797 = vmatprep.subr.bf16.mxu0 0
    %798 = vmatpush2.bf16.msra.mxu0 %v603
    %799 = vmatprep.subr.bf16.mxu0 0
    %800 = vmatpush2.bf16.msra.mxu0 %v602
    %801 = vmatprep.subr.bf16.mxu0 0
    %802 = vmatpush2.bf16.msra.mxu0 %v601
    %803 = vmatprep.mubr.bf16.mxu0 %v294
    %804 = vmatmul.mubr.bf16.gmra.mxu0 %v293
    %v805 = vpop.f32.mrf.mxu0
    %v806 = vadd.f32 %v765, %v805
    %v807 = vpop.f32.mrf.mxu0
    %v808 = vpop.f32.mrf.mxu0
    %v809 = vadd.f32 %v768, %v808
    %v810 = vpop.f32.mrf.mxu0
    %811 = vdwg.mxu0
    %812 = vmatprep.subr.bf16.mxu0 0
    %813 = vmatpush1.bf16.msra.mxu0 %v616
    %814 = vmatprep.subr.bf16.mxu0 0
    %815 = vmatpush1.bf16.msra.mxu0 %v615
    %816 = vmatprep.subr.bf16.mxu0 0
    %817 = vmatpush1.bf16.msra.mxu0 %v614
    %818 = vmatprep.subr.bf16.mxu0 0
    %819 = vmatpush1.bf16.msra.mxu0 %v613
    %820 = vmatprep.subr.bf16.mxu0 0
    %821 = vmatpush1.bf16.msra.mxu0 %v612
    %822 = vmatprep.subr.bf16.mxu0 0
    %823 = vmatpush1.bf16.msra.mxu0 %v611
    %824 = vmatprep.subr.bf16.mxu0 0
    %825 = vmatpush1.bf16.msra.mxu0 %v610
    %826 = vmatprep.subr.bf16.mxu0 0
    %827 = vmatpush1.bf16.msra.mxu0 %v609
    %828 = vmatprep.subr.bf16.mxu0 0
    %829 = vmatpush2.bf16.msra.mxu0 %v624
    %830 = vmatprep.subr.bf16.mxu0 0
    %831 = vmatpush2.bf16.msra.mxu0 %v623
    %832 = vmatprep.subr.bf16.mxu0 0
    %833 = vmatpush2.bf16.msra.mxu0 %v622
    %834 = vmatprep.subr.bf16.mxu0 0
    %835 = vmatpush2.bf16.msra.mxu0 %v621
    %836 = vmatprep.subr.bf16.mxu0 0
    %837 = vmatpush2.bf16.msra.mxu0 %v620
    %838 = vmatprep.subr.bf16.mxu0 0
    %839 = vmatpush2.bf16.msra.mxu0 %v619
    %840 = vmatprep.subr.bf16.mxu0 0
    %841 = vmatpush2.bf16.msra.mxu0 %v618
    %842 = vmatprep.subr.bf16.mxu0 0
    %843 = vmatpush2.bf16.msra.mxu0 %v617
    %844 = vmatprep.mubr.bf16.mxu0 %v296
    %845 = vmatmul.mubr.bf16.gmra.mxu0 %v295
    %v846 = vpop.f32.mrf.mxu0
    %v847 = vadd.f32 %v806, %v846
    %v848 = vpop.f32.mrf.mxu0
    %v849 = vpop.f32.mrf.mxu0
    %v850 = vadd.f32 %v809, %v849
    %v851 = vpop.f32.mrf.mxu0
    %852 = vdwg.mxu0
    %v853 = vmax.f32 %v847, 0.0
    %v854 = vmax.f32 %v850, 0.0
    %v855 = vpack.c.bf16 %v854, %v853
    %v856 = vld [vmem:[#allocation10] sm:$0xf]
    %v857 = vld [vmem:[#allocation10 + $0x4] sm:$0xf]
    %v858 = vld [vmem:[#allocation10 + $0x8] sm:$0xf]
    %v859 = vld [vmem:[#allocation10 + $0xc] sm:$0xf]
    %v860 = vld [vmem:[#allocation10 + $0x10] sm:$0xf]
    %v861 = vld [vmem:[#allocation10 + $0x14] sm:$0xf]
    %v862 = vld [vmem:[#allocation10 + $0x18] sm:$0xf]
    %v863 = vld [vmem:[#allocation10 + $0x1c] sm:$0xf]
    %v864 = vld [vmem:[#allocation10 + $0x20] sm:$0xf]
    %v865 = vld [vmem:[#allocation10 + $0x24] sm:$0xf]
    %v866 = vld [vmem:[#allocation10 + $0x28] sm:$0xf]
    %v867 = vld [vmem:[#allocation10 + $0x2c] sm:$0xf]
    %v868 = vld [vmem:[#allocation10 + $0x30] sm:$0xf]
    %v869 = vld [vmem:[#allocation10 + $0x34] sm:$0xf]
    %v870 = vld [vmem:[#allocation10 + $0x38] sm:$0xf]
    %v871 = vld [vmem:[#allocation10 + $0x3c] sm:$0xf]
    %v872 = vld [vmem:[%s5] sm:$0x1]
    %v874 = vlaneseq
    %v875 = vshrl.u32 %v874, 7
    %v876 = vsub.s32 0, %v875
    %v877 = vrot.slane %v872, %v876
    %v895 = vunpack.c.l.b16 %v856
    %v896 = vunpack.c.l.b16 %v857
    %v897 = vunpack.c.l.b16 %v858
    %v898 = vunpack.c.l.b16 %v859
    %v899 = vunpack.c.l.b16 %v860
    %v900 = vunpack.c.l.b16 %v861
    %v901 = vunpack.c.l.b16 %v862
    %v902 = vunpack.c.l.b16 %v863
    %v903 = vunpack.c.l.b16 %v864
    %v904 = vunpack.c.l.b16 %v865
    %v905 = vunpack.c.l.b16 %v866
    %v906 = vunpack.c.l.b16 %v867
    %v907 = vunpack.c.l.b16 %v868
    %v908 = vunpack.c.l.b16 %v869
    %v909 = vunpack.c.l.b16 %v870
    %v910 = vunpack.c.l.b16 %v871
    %v911 = vpack.c.b16 %v896, %v895
    %v912 = vpack.c.b16 %v898, %v897
    %v913 = vpack.c.b16 %v900, %v899
    %v914 = vpack.c.b16 %v902, %v901
    %v915 = vpack.c.b16 %v904, %v903
    %v916 = vpack.c.b16 %v906, %v905
    %v917 = vpack.c.b16 %v908, %v907
    %v918 = vpack.c.b16 %v910, %v909
    %927 = vmatprep.subr.bf16.mxu0 0
    %928 = vmatpush1.bf16.msra.mxu0 %v918
    %929 = vmatprep.subr.bf16.mxu0 0
    %930 = vmatpush1.bf16.msra.mxu0 %v917
    %931 = vmatprep.subr.bf16.mxu0 0
    %932 = vmatpush1.bf16.msra.mxu0 %v916
    %933 = vmatprep.subr.bf16.mxu0 0
    %934 = vmatpush1.bf16.msra.mxu0 %v915
    %935 = vmatprep.subr.bf16.mxu0 0
    %936 = vmatpush1.bf16.msra.mxu0 %v914
    %937 = vmatprep.subr.bf16.mxu0 0
    %938 = vmatpush1.bf16.msra.mxu0 %v913
    %939 = vmatprep.subr.bf16.mxu0 0
    %940 = vmatpush1.bf16.msra.mxu0 %v912
    %941 = vmatprep.subr.bf16.mxu0 0
    %942 = vmatpush1.bf16.msra.mxu0 %v911
    %943 = vmatprep.subr.bf16.mxu0 0
    %944 = vmatpush2.bf16.msra.mxu0 0
    %945 = vmatprep.subr.bf16.mxu0 0
    %946 = vmatpush2.bf16.msra.mxu0 0
    %947 = vmatprep.subr.bf16.mxu0 0
    %948 = vmatpush2.bf16.msra.mxu0 0
    %949 = vmatprep.subr.bf16.mxu0 0
    %950 = vmatpush2.bf16.msra.mxu0 0
    %951 = vmatprep.subr.bf16.mxu0 0
    %952 = vmatpush2.bf16.msra.mxu0 0
    %953 = vmatprep.subr.bf16.mxu0 0
    %954 = vmatpush2.bf16.msra.mxu0 0
    %955 = vmatprep.subr.bf16.mxu0 0
    %956 = vmatpush2.bf16.msra.mxu0 0
    %957 = vmatprep.subr.bf16.mxu0 0
    %958 = vmatpush2.bf16.msra.mxu0 0
    %959 = vmatprep.mubr.bf16.mxu0 0
    %960 = vmatmul.mubr.bf16.gmra.mxu0 %v855
    %v961 = vpop.f32.mrf.mxu0
    %v962 = vadd.f32 %v877, %v961
    %v963 = vpop.f32.mrf.mxu0
    %v964 = vpop.f32.mrf.mxu0
    %v965 = vadd.f32 %v877, %v964
    %v966 = vpop.f32.mrf.mxu0
    %967 = vdwg.mxu0
    %968 = vst [vmem:[#allocation14] sm:$0xff] %v962
    %969 = vst [vmem:[#allocation14 + $0x8] sm:$0xff] %v965
    %v970 = vld [vmem:[#allocation11] sm:$0xf]
    %v971 = vld [vmem:[#allocation11 + $0x4] sm:$0xf]
    %v972 = vld [vmem:[#allocation11 + $0x8] sm:$0xf]
    %v973 = vld [vmem:[#allocation11 + $0xc] sm:$0xf]
    %v974 = vld [vmem:[#allocation11 + $0x10] sm:$0xf]
    %v975 = vld [vmem:[#allocation11 + $0x14] sm:$0xf]
    %v976 = vld [vmem:[#allocation11 + $0x18] sm:$0xf]
    %v977 = vld [vmem:[#allocation11 + $0x1c] sm:$0xf]
    %v978 = vld [vmem:[#allocation11 + $0x20] sm:$0xf]
    %v979 = vld [vmem:[#allocation11 + $0x24] sm:$0xf]
    %v980 = vld [vmem:[#allocation11 + $0x28] sm:$0xf]
    %v981 = vld [vmem:[#allocation11 + $0x2c] sm:$0xf]
    %v982 = vld [vmem:[#allocation11 + $0x30] sm:$0xf]
    %v983 = vld [vmem:[#allocation11 + $0x34] sm:$0xf]
    %v984 = vld [vmem:[#allocation11 + $0x38] sm:$0xf]
    %v985 = vld [vmem:[#allocation11 + $0x3c] sm:$0xf]
    %v986 = vld [vmem:[#allocation11 + $0x40] sm:$0xf]
    %v987 = vld [vmem:[#allocation11 + $0x44] sm:$0xf]
    %v988 = vld [vmem:[#allocation11 + $0x48] sm:$0xf]
    %v989 = vld [vmem:[#allocation11 + $0x4c] sm:$0xf]
    %v990 = vld [vmem:[#allocation11 + $0x50] sm:$0xf]
    %v991 = vld [vmem:[#allocation11 + $0x54] sm:$0xf]
    %v992 = vld [vmem:[#allocation11 + $0x58] sm:$0xf]
    %v993 = vld [vmem:[#allocation11 + $0x5c] sm:$0xf]
    %v994 = vld [vmem:[#allocation11 + $0x60] sm:$0xf]
    %v995 = vld [vmem:[#allocation11 + $0x64] sm:$0xf]
    %v996 = vld [vmem:[#allocation11 + $0x68] sm:$0xf]
    %v997 = vld [vmem:[#allocation11 + $0x6c] sm:$0xf]
    %v998 = vld [vmem:[#allocation11 + $0x70] sm:$0xf]
    %v999 = vld [vmem:[#allocation11 + $0x74] sm:$0xf]
    %v1000 = vld [vmem:[#allocation11 + $0x78] sm:$0xf]
    %v1001 = vld [vmem:[#allocation11 + $0x7c] sm:$0xf]
    %v1002 = vld [vmem:[#allocation11 + $0x80] sm:$0xf]
    %v1003 = vld [vmem:[#allocation11 + $0x84] sm:$0xf]
    %v1004 = vld [vmem:[#allocation11 + $0x88] sm:$0xf]
    %v1005 = vld [vmem:[#allocation11 + $0x8c] sm:$0xf]
    %v1006 = vld [vmem:[#allocation11 + $0x90] sm:$0xf]
    %v1007 = vld [vmem:[#allocation11 + $0x94] sm:$0xf]
    %v1008 = vld [vmem:[#allocation11 + $0x98] sm:$0xf]
    %v1009 = vld [vmem:[#allocation11 + $0x9c] sm:$0xf]
    %v1010 = vld [vmem:[#allocation11 + $0xa0] sm:$0xf]
    %v1011 = vld [vmem:[#allocation11 + $0xa4] sm:$0xf]
    %v1012 = vld [vmem:[#allocation11 + $0xa8] sm:$0xf]
    %v1013 = vld [vmem:[#allocation11 + $0xac] sm:$0xf]
    %v1014 = vld [vmem:[#allocation11 + $0xb0] sm:$0xf]
    %v1015 = vld [vmem:[#allocation11 + $0xb4] sm:$0xf]
    %v1016 = vld [vmem:[#allocation11 + $0xb8] sm:$0xf]
    %v1017 = vld [vmem:[#allocation11 + $0xbc] sm:$0xf]
    %v1018 = vld [vmem:[#allocation11 + $0xc0] sm:$0xf]
    %v1019 = vld [vmem:[#allocation11 + $0xc4] sm:$0xf]
    %v1020 = vld [vmem:[#allocation11 + $0xc8] sm:$0xf]
    %v1021 = vld [vmem:[#allocation11 + $0xcc] sm:$0xf]
    %v1022 = vld [vmem:[#allocation11 + $0xd0] sm:$0xf]
    %v1023 = vld [vmem:[#allocation11 + $0xd4] sm:$0xf]
    %v1024 = vld [vmem:[#allocation11 + $0xd8] sm:$0xf]
    %v1025 = vld [vmem:[#allocation11 + $0xdc] sm:$0xf]
    %v1026 = vld [vmem:[#allocation11 + $0xe0] sm:$0xf]
    %v1027 = vld [vmem:[#allocation11 + $0xe4] sm:$0xf]
    %v1028 = vld [vmem:[#allocation11 + $0xe8] sm:$0xf]
    %v1029 = vld [vmem:[#allocation11 + $0xec] sm:$0xf]
    %v1030 = vld [vmem:[#allocation11 + $0xf0] sm:$0xf]
    %v1031 = vld [vmem:[#allocation11 + $0xf4] sm:$0xf]
    %v1032 = vld [vmem:[#allocation11 + $0xf8] sm:$0xf]
    %v1033 = vld [vmem:[#allocation11 + $0xfc] sm:$0xf]
    %v1034 = vld [vmem:[#allocation11 + $0x100] sm:$0xf]
    %v1035 = vld [vmem:[#allocation11 + $0x104] sm:$0xf]
    %v1036 = vld [vmem:[#allocation11 + $0x108] sm:$0xf]
    %v1037 = vld [vmem:[#allocation11 + $0x10c] sm:$0xf]
    %v1038 = vld [vmem:[#allocation11 + $0x110] sm:$0xf]
    %v1039 = vld [vmem:[#allocation11 + $0x114] sm:$0xf]
    %v1040 = vld [vmem:[#allocation11 + $0x118] sm:$0xf]
    %v1041 = vld [vmem:[#allocation11 + $0x11c] sm:$0xf]
    %v1042 = vld [vmem:[#allocation11 + $0x120] sm:$0xf]
    %v1043 = vld [vmem:[#allocation11 + $0x124] sm:$0xf]
    %v1044 = vld [vmem:[#allocation11 + $0x128] sm:$0xf]
    %v1045 = vld [vmem:[#allocation11 + $0x12c] sm:$0xf]
    %v1046 = vld [vmem:[#allocation11 + $0x130] sm:$0xf]
    %v1047 = vld [vmem:[#allocation11 + $0x134] sm:$0xf]
    %v1048 = vld [vmem:[#allocation11 + $0x138] sm:$0xf]
    %v1049 = vld [vmem:[#allocation11 + $0x13c] sm:$0xf]
    %v1050 = vld [vmem:[#allocation11 + $0x140] sm:$0xf]
    %v1051 = vld [vmem:[#allocation11 + $0x144] sm:$0xf]
    %v1052 = vld [vmem:[#allocation11 + $0x148] sm:$0xf]
    %v1053 = vld [vmem:[#allocation11 + $0x14c] sm:$0xf]
    %v1054 = vld [vmem:[#allocation11 + $0x150] sm:$0xf]
    %v1055 = vld [vmem:[#allocation11 + $0x154] sm:$0xf]
    %v1056 = vld [vmem:[#allocation11 + $0x158] sm:$0xf]
    %v1057 = vld [vmem:[#allocation11 + $0x15c] sm:$0xf]
    %v1058 = vld [vmem:[#allocation11 + $0x160] sm:$0xf]
    %v1059 = vld [vmem:[#allocation11 + $0x164] sm:$0xf]
    %v1060 = vld [vmem:[#allocation11 + $0x168] sm:$0xf]
    %v1061 = vld [vmem:[#allocation11 + $0x16c] sm:$0xf]
    %v1062 = vld [vmem:[#allocation11 + $0x170] sm:$0xf]
    %v1063 = vld [vmem:[#allocation11 + $0x174] sm:$0xf]
    %v1064 = vld [vmem:[#allocation11 + $0x178] sm:$0xf]
    %v1065 = vld [vmem:[#allocation11 + $0x17c] sm:$0xf]
    %v1066 = vld [vmem:[#allocation11 + $0x180] sm:$0xf]
    %v1067 = vld [vmem:[#allocation11 + $0x184] sm:$0xf]
    %v1068 = vld [vmem:[#allocation11 + $0x188] sm:$0xf]
    %v1069 = vld [vmem:[#allocation11 + $0x18c] sm:$0xf]
    %v1070 = vld [vmem:[#allocation11 + $0x190] sm:$0xf]
    %v1071 = vld [vmem:[#allocation11 + $0x194] sm:$0xf]
    %v1072 = vld [vmem:[#allocation11 + $0x198] sm:$0xf]
    %v1073 = vld [vmem:[#allocation11 + $0x19c] sm:$0xf]
    %v1074 = vld [vmem:[#allocation11 + $0x1a0] sm:$0xf]
    %v1075 = vld [vmem:[#allocation11 + $0x1a4] sm:$0xf]
    %v1076 = vld [vmem:[#allocation11 + $0x1a8] sm:$0xf]
    %v1077 = vld [vmem:[#allocation11 + $0x1ac] sm:$0xf]
    %v1078 = vld [vmem:[#allocation11 + $0x1b0] sm:$0xf]
    %v1079 = vld [vmem:[#allocation11 + $0x1b4] sm:$0xf]
    %v1080 = vld [vmem:[#allocation11 + $0x1b8] sm:$0xf]
    %v1081 = vld [vmem:[#allocation11 + $0x1bc] sm:$0xf]
    %v1082 = vld [vmem:[#allocation11 + $0x1c0] sm:$0xf]
    %v1083 = vld [vmem:[#allocation11 + $0x1c4] sm:$0xf]
    %v1084 = vld [vmem:[#allocation11 + $0x1c8] sm:$0xf]
    %v1085 = vld [vmem:[#allocation11 + $0x1cc] sm:$0xf]
    %v1086 = vld [vmem:[#allocation11 + $0x1d0] sm:$0xf]
    %v1087 = vld [vmem:[#allocation11 + $0x1d4] sm:$0xf]
    %v1088 = vld [vmem:[#allocation11 + $0x1d8] sm:$0xf]
    %v1089 = vld [vmem:[#allocation11 + $0x1dc] sm:$0xf]
    %v1090 = vld [vmem:[#allocation11 + $0x1e0] sm:$0xf]
    %v1091 = vld [vmem:[#allocation11 + $0x1e4] sm:$0xf]
    %v1092 = vld [vmem:[#allocation11 + $0x1e8] sm:$0xf]
    %v1093 = vld [vmem:[#allocation11 + $0x1ec] sm:$0xf]
    %v1094 = vld [vmem:[#allocation11 + $0x1f0] sm:$0xf]
    %v1095 = vld [vmem:[#allocation11 + $0x1f4] sm:$0xf]
    %v1096 = vld [vmem:[#allocation11 + $0x1f8] sm:$0xf]
    %v1097 = vld [vmem:[#allocation11 + $0x1fc] sm:$0xf]
    %v1098 = vld [vmem:[%s7] sm:$0x1]
    %v1100 = vlaneseq
    %v1101 = vshrl.u32 %v1100, 7
    %v1102 = vsub.s32 0, %v1101
    %v1103 = vrot.slane %v1098, %v1102
    %v1233 = vunpack.c.l.b16 %v970
    %v1234 = vunpack.c.l.b16 %v971
    %v1235 = vunpack.c.l.b16 %v972
    %v1236 = vunpack.c.l.b16 %v973
    %v1237 = vunpack.c.l.b16 %v974
    %v1238 = vunpack.c.l.b16 %v975
    %v1239 = vunpack.c.l.b16 %v976
    %v1240 = vunpack.c.l.b16 %v977
    %v1241 = vunpack.c.l.b16 %v978
    %v1242 = vunpack.c.l.b16 %v979
    %v1243 = vunpack.c.l.b16 %v980
    %v1244 = vunpack.c.l.b16 %v981
    %v1245 = vunpack.c.l.b16 %v982
    %v1246 = vunpack.c.l.b16 %v983
    %v1247 = vunpack.c.l.b16 %v984
    %v1248 = vunpack.c.l.b16 %v985
    %v1249 = vunpack.c.l.b16 %v986
    %v1250 = vunpack.c.l.b16 %v987
    %v1251 = vunpack.c.l.b16 %v988
    %v1252 = vunpack.c.l.b16 %v989
    %v1253 = vunpack.c.l.b16 %v990
    %v1254 = vunpack.c.l.b16 %v991
    %v1255 = vunpack.c.l.b16 %v992
    %v1256 = vunpack.c.l.b16 %v993
    %v1257 = vunpack.c.l.b16 %v994
    %v1258 = vunpack.c.l.b16 %v995
    %v1259 = vunpack.c.l.b16 %v996
    %v1260 = vunpack.c.l.b16 %v997
    %v1261 = vunpack.c.l.b16 %v998
    %v1262 = vunpack.c.l.b16 %v999
    %v1263 = vunpack.c.l.b16 %v1000
    %v1264 = vunpack.c.l.b16 %v1001
    %v1265 = vunpack.c.l.b16 %v1002
    %v1266 = vunpack.c.l.b16 %v1003
    %v1267 = vunpack.c.l.b16 %v1004
    %v1268 = vunpack.c.l.b16 %v1005
    %v1269 = vunpack.c.l.b16 %v1006
    %v1270 = vunpack.c.l.b16 %v1007
    %v1271 = vunpack.c.l.b16 %v1008
    %v1272 = vunpack.c.l.b16 %v1009
    %v1273 = vunpack.c.l.b16 %v1010
    %v1274 = vunpack.c.l.b16 %v1011
    %v1275 = vunpack.c.l.b16 %v1012
    %v1276 = vunpack.c.l.b16 %v1013
    %v1277 = vunpack.c.l.b16 %v1014
    %v1278 = vunpack.c.l.b16 %v1015
    %v1279 = vunpack.c.l.b16 %v1016
    %v1280 = vunpack.c.l.b16 %v1017
    %v1281 = vunpack.c.l.b16 %v1018
    %v1282 = vunpack.c.l.b16 %v1019
    %v1283 = vunpack.c.l.b16 %v1020
    %v1284 = vunpack.c.l.b16 %v1021
    %v1285 = vunpack.c.l.b16 %v1022
    %v1286 = vunpack.c.l.b16 %v1023
    %v1287 = vunpack.c.l.b16 %v1024
    %v1288 = vunpack.c.l.b16 %v1025
    %v1289 = vunpack.c.l.b16 %v1026
    %v1290 = vunpack.c.l.b16 %v1027
    %v1291 = vunpack.c.l.b16 %v1028
    %v1292 = vunpack.c.l.b16 %v1029
    %v1293 = vunpack.c.l.b16 %v1030
    %v1294 = vunpack.c.l.b16 %v1031
    %v1295 = vunpack.c.l.b16 %v1032
    %v1296 = vunpack.c.l.b16 %v1033
    %v1297 = vunpack.c.l.b16 %v1034
    %v1298 = vunpack.c.l.b16 %v1035
    %v1299 = vunpack.c.l.b16 %v1036
    %v1300 = vunpack.c.l.b16 %v1037
    %v1301 = vunpack.c.l.b16 %v1038
    %v1302 = vunpack.c.l.b16 %v1039
    %v1303 = vunpack.c.l.b16 %v1040
    %v1304 = vunpack.c.l.b16 %v1041
    %v1305 = vunpack.c.l.b16 %v1042
    %v1306 = vunpack.c.l.b16 %v1043
    %v1307 = vunpack.c.l.b16 %v1044
    %v1308 = vunpack.c.l.b16 %v1045
    %v1309 = vunpack.c.l.b16 %v1046
    %v1310 = vunpack.c.l.b16 %v1047
    %v1311 = vunpack.c.l.b16 %v1048
    %v1312 = vunpack.c.l.b16 %v1049
    %v1313 = vunpack.c.l.b16 %v1050
    %v1314 = vunpack.c.l.b16 %v1051
    %v1315 = vunpack.c.l.b16 %v1052
    %v1316 = vunpack.c.l.b16 %v1053
    %v1317 = vunpack.c.l.b16 %v1054
    %v1318 = vunpack.c.l.b16 %v1055
    %v1319 = vunpack.c.l.b16 %v1056
    %v1320 = vunpack.c.l.b16 %v1057
    %v1321 = vunpack.c.l.b16 %v1058
    %v1322 = vunpack.c.l.b16 %v1059
    %v1323 = vunpack.c.l.b16 %v1060
    %v1324 = vunpack.c.l.b16 %v1061
    %v1325 = vunpack.c.l.b16 %v1062
    %v1326 = vunpack.c.l.b16 %v1063
    %v1327 = vunpack.c.l.b16 %v1064
    %v1328 = vunpack.c.l.b16 %v1065
    %v1329 = vunpack.c.l.b16 %v1066
    %v1330 = vunpack.c.l.b16 %v1067
    %v1331 = vunpack.c.l.b16 %v1068
    %v1332 = vunpack.c.l.b16 %v1069
    %v1333 = vunpack.c.l.b16 %v1070
    %v1334 = vunpack.c.l.b16 %v1071
    %v1335 = vunpack.c.l.b16 %v1072
    %v1336 = vunpack.c.l.b16 %v1073
    %v1337 = vunpack.c.l.b16 %v1074
    %v1338 = vunpack.c.l.b16 %v1075
    %v1339 = vunpack.c.l.b16 %v1076
    %v1340 = vunpack.c.l.b16 %v1077
    %v1341 = vunpack.c.l.b16 %v1078
    %v1342 = vunpack.c.l.b16 %v1079
    %v1343 = vunpack.c.l.b16 %v1080
    %v1344 = vunpack.c.l.b16 %v1081
    %v1345 = vunpack.c.l.b16 %v1082
    %v1346 = vunpack.c.l.b16 %v1083
    %v1347 = vunpack.c.l.b16 %v1084
    %v1348 = vunpack.c.l.b16 %v1085
    %v1349 = vunpack.c.l.b16 %v1086
    %v1350 = vunpack.c.l.b16 %v1087
    %v1351 = vunpack.c.l.b16 %v1088
    %v1352 = vunpack.c.l.b16 %v1089
    %v1353 = vunpack.c.l.b16 %v1090
    %v1354 = vunpack.c.l.b16 %v1091
    %v1355 = vunpack.c.l.b16 %v1092
    %v1356 = vunpack.c.l.b16 %v1093
    %v1357 = vunpack.c.l.b16 %v1094
    %v1358 = vunpack.c.l.b16 %v1095
    %v1359 = vunpack.c.l.b16 %v1096
    %v1360 = vunpack.c.l.b16 %v1097
    %v1361 = vpack.c.b16 %v1234, %v1233
    %v1362 = vpack.c.b16 %v1236, %v1235
    %v1363 = vpack.c.b16 %v1238, %v1237
    %v1364 = vpack.c.b16 %v1240, %v1239
    %v1365 = vpack.c.b16 %v1242, %v1241
    %v1366 = vpack.c.b16 %v1244, %v1243
    %v1367 = vpack.c.b16 %v1246, %v1245
    %v1368 = vpack.c.b16 %v1248, %v1247
    %v1369 = vpack.c.b16 %v1250, %v1249
    %v1370 = vpack.c.b16 %v1252, %v1251
    %v1371 = vpack.c.b16 %v1254, %v1253
    %v1372 = vpack.c.b16 %v1256, %v1255
    %v1373 = vpack.c.b16 %v1258, %v1257
    %v1374 = vpack.c.b16 %v1260, %v1259
    %v1375 = vpack.c.b16 %v1262, %v1261
    %v1376 = vpack.c.b16 %v1264, %v1263
    %v1377 = vpack.c.b16 %v1266, %v1265
    %v1378 = vpack.c.b16 %v1268, %v1267
    %v1379 = vpack.c.b16 %v1270, %v1269
    %v1380 = vpack.c.b16 %v1272, %v1271
    %v1381 = vpack.c.b16 %v1274, %v1273
    %v1382 = vpack.c.b16 %v1276, %v1275
    %v1383 = vpack.c.b16 %v1278, %v1277
    %v1384 = vpack.c.b16 %v1280, %v1279
    %v1385 = vpack.c.b16 %v1282, %v1281
    %v1386 = vpack.c.b16 %v1284, %v1283
    %v1387 = vpack.c.b16 %v1286, %v1285
    %v1388 = vpack.c.b16 %v1288, %v1287
    %v1389 = vpack.c.b16 %v1290, %v1289
    %v1390 = vpack.c.b16 %v1292, %v1291
    %v1391 = vpack.c.b16 %v1294, %v1293
    %v1392 = vpack.c.b16 %v1296, %v1295
    %v1393 = vpack.c.b16 %v1298, %v1297
    %v1394 = vpack.c.b16 %v1300, %v1299
    %v1395 = vpack.c.b16 %v1302, %v1301
    %v1396 = vpack.c.b16 %v1304, %v1303
    %v1397 = vpack.c.b16 %v1306, %v1305
    %v1398 = vpack.c.b16 %v1308, %v1307
    %v1399 = vpack.c.b16 %v1310, %v1309
    %v1400 = vpack.c.b16 %v1312, %v1311
    %v1401 = vpack.c.b16 %v1314, %v1313
    %v1402 = vpack.c.b16 %v1316, %v1315
    %v1403 = vpack.c.b16 %v1318, %v1317
    %v1404 = vpack.c.b16 %v1320, %v1319
    %v1405 = vpack.c.b16 %v1322, %v1321
    %v1406 = vpack.c.b16 %v1324, %v1323
    %v1407 = vpack.c.b16 %v1326, %v1325
    %v1408 = vpack.c.b16 %v1328, %v1327
    %v1409 = vpack.c.b16 %v1330, %v1329
    %v1410 = vpack.c.b16 %v1332, %v1331
    %v1411 = vpack.c.b16 %v1334, %v1333
    %v1412 = vpack.c.b16 %v1336, %v1335
    %v1413 = vpack.c.b16 %v1338, %v1337
    %v1414 = vpack.c.b16 %v1340, %v1339
    %v1415 = vpack.c.b16 %v1342, %v1341
    %v1416 = vpack.c.b16 %v1344, %v1343
    %v1417 = vpack.c.b16 %v1346, %v1345
    %v1418 = vpack.c.b16 %v1348, %v1347
    %v1419 = vpack.c.b16 %v1350, %v1349
    %v1420 = vpack.c.b16 %v1352, %v1351
    %v1421 = vpack.c.b16 %v1354, %v1353
    %v1422 = vpack.c.b16 %v1356, %v1355
    %v1423 = vpack.c.b16 %v1358, %v1357
    %v1424 = vpack.c.b16 %v1360, %v1359
    %1489 = vmatprep.subr.bf16.mxu0 0
    %1490 = vmatpush1.bf16.msra.mxu0 %v1368
    %1491 = vmatprep.subr.bf16.mxu0 0
    %1492 = vmatpush1.bf16.msra.mxu0 %v1367
    %1493 = vmatprep.subr.bf16.mxu0 0
    %1494 = vmatpush1.bf16.msra.mxu0 %v1366
    %1495 = vmatprep.subr.bf16.mxu0 0
    %1496 = vmatpush1.bf16.msra.mxu0 %v1365
    %1497 = vmatprep.subr.bf16.mxu0 0
    %1498 = vmatpush1.bf16.msra.mxu0 %v1364
    %1499 = vmatprep.subr.bf16.mxu0 0
    %1500 = vmatpush1.bf16.msra.mxu0 %v1363
    %1501 = vmatprep.subr.bf16.mxu0 0
    %1502 = vmatpush1.bf16.msra.mxu0 %v1362
    %1503 = vmatprep.subr.bf16.mxu0 0
    %1504 = vmatpush1.bf16.msra.mxu0 %v1361
    %1505 = vmatprep.subr.bf16.mxu0 0
    %1506 = vmatpush2.bf16.msra.mxu0 %v1376
    %1507 = vmatprep.subr.bf16.mxu0 0
    %1508 = vmatpush2.bf16.msra.mxu0 %v1375
    %1509 = vmatprep.subr.bf16.mxu0 0
    %1510 = vmatpush2.bf16.msra.mxu0 %v1374
    %1511 = vmatprep.subr.bf16.mxu0 0
    %1512 = vmatpush2.bf16.msra.mxu0 %v1373
    %1513 = vmatprep.subr.bf16.mxu0 0
    %1514 = vmatpush2.bf16.msra.mxu0 %v1372
    %1515 = vmatprep.subr.bf16.mxu0 0
    %1516 = vmatpush2.bf16.msra.mxu0 %v1371
    %1517 = vmatprep.subr.bf16.mxu0 0
    %1518 = vmatpush2.bf16.msra.mxu0 %v1370
    %1519 = vmatprep.subr.bf16.mxu0 0
    %1520 = vmatpush2.bf16.msra.mxu0 %v1369
    %1521 = vmatprep.mubr.bf16.mxu0 %v290
    %1522 = vmatmul.mubr.bf16.gmra.mxu0 %v289
    %v1523 = vpop.f32.mrf.mxu0
    %v1524 = vadd.f32 %v1103, %v1523
    %v1525 = vpop.f32.mrf.mxu0
    %v1526 = vpop.f32.mrf.mxu0
    %v1527 = vadd.f32 %v1103, %v1526
    %v1528 = vpop.f32.mrf.mxu0
    %1529 = vdwg.mxu0
    %1530 = vmatprep.subr.bf16.mxu0 0
    %1531 = vmatpush1.bf16.msra.mxu0 %v1384
    %1532 = vmatprep.subr.bf16.mxu0 0
    %1533 = vmatpush1.bf16.msra.mxu0 %v1383
    %1534 = vmatprep.subr.bf16.mxu0 0
    %1535 = vmatpush1.bf16.msra.mxu0 %v1382
    %1536 = vmatprep.subr.bf16.mxu0 0
    %1537 = vmatpush1.bf16.msra.mxu0 %v1381
    %1538 = vmatprep.subr.bf16.mxu0 0
    %1539 = vmatpush1.bf16.msra.mxu0 %v1380
    %1540 = vmatprep.subr.bf16.mxu0 0
    %1541 = vmatpush1.bf16.msra.mxu0 %v1379
    %1542 = vmatprep.subr.bf16.mxu0 0
    %1543 = vmatpush1.bf16.msra.mxu0 %v1378
    %1544 = vmatprep.subr.bf16.mxu0 0
    %1545 = vmatpush1.bf16.msra.mxu0 %v1377
    %1546 = vmatprep.subr.bf16.mxu0 0
    %1547 = vmatpush2.bf16.msra.mxu0 %v1392
    %1548 = vmatprep.subr.bf16.mxu0 0
    %1549 = vmatpush2.bf16.msra.mxu0 %v1391
    %1550 = vmatprep.subr.bf16.mxu0 0
    %1551 = vmatpush2.bf16.msra.mxu0 %v1390
    %1552 = vmatprep.subr.bf16.mxu0 0
    %1553 = vmatpush2.bf16.msra.mxu0 %v1389
    %1554 = vmatprep.subr.bf16.mxu0 0
    %1555 = vmatpush2.bf16.msra.mxu0 %v1388
    %1556 = vmatprep.subr.bf16.mxu0 0
    %1557 = vmatpush2.bf16.msra.mxu0 %v1387
    %1558 = vmatprep.subr.bf16.mxu0 0
    %1559 = vmatpush2.bf16.msra.mxu0 %v1386
    %1560 = vmatprep.subr.bf16.mxu0 0
    %1561 = vmatpush2.bf16.msra.mxu0 %v1385
    %1562 = vmatprep.mubr.bf16.mxu0 %v292
    %1563 = vmatmul.mubr.bf16.gmra.mxu0 %v291
    %v1564 = vpop.f32.mrf.mxu0
    %v1565 = vadd.f32 %v1524, %v1564
    %v1566 = vpop.f32.mrf.mxu0
    %v1567 = vpop.f32.mrf.mxu0
    %v1568 = vadd.f32 %v1527, %v1567
    %v1569 = vpop.f32.mrf.mxu0
    %1570 = vdwg.mxu0
    %1571 = vmatprep.subr.bf16.mxu0 0
    %1572 = vmatpush1.bf16.msra.mxu0 %v1400
    %1573 = vmatprep.subr.bf16.mxu0 0
    %1574 = vmatpush1.bf16.msra.mxu0 %v1399
    %1575 = vmatprep.subr.bf16.mxu0 0
    %1576 = vmatpush1.bf16.msra.mxu0 %v1398
    %1577 = vmatprep.subr.bf16.mxu0 0
    %1578 = vmatpush1.bf16.msra.mxu0 %v1397
    %1579 = vmatprep.subr.bf16.mxu0 0
    %1580 = vmatpush1.bf16.msra.mxu0 %v1396
    %1581 = vmatprep.subr.bf16.mxu0 0
    %1582 = vmatpush1.bf16.msra.mxu0 %v1395
    %1583 = vmatprep.subr.bf16.mxu0 0
    %1584 = vmatpush1.bf16.msra.mxu0 %v1394
    %1585 = vmatprep.subr.bf16.mxu0 0
    %1586 = vmatpush1.bf16.msra.mxu0 %v1393
    %1587 = vmatprep.subr.bf16.mxu0 0
    %1588 = vmatpush2.bf16.msra.mxu0 %v1408
    %1589 = vmatprep.subr.bf16.mxu0 0
    %1590 = vmatpush2.bf16.msra.mxu0 %v1407
    %1591 = vmatprep.subr.bf16.mxu0 0
    %1592 = vmatpush2.bf16.msra.mxu0 %v1406
    %1593 = vmatprep.subr.bf16.mxu0 0
    %1594 = vmatpush2.bf16.msra.mxu0 %v1405
    %1595 = vmatprep.subr.bf16.mxu0 0
    %1596 = vmatpush2.bf16.msra.mxu0 %v1404
    %1597 = vmatprep.subr.bf16.mxu0 0
    %1598 = vmatpush2.bf16.msra.mxu0 %v1403
    %1599 = vmatprep.subr.bf16.mxu0 0
    %1600 = vmatpush2.bf16.msra.mxu0 %v1402
    %1601 = vmatprep.subr.bf16.mxu0 0
    %1602 = vmatpush2.bf16.msra.mxu0 %v1401
    %1603 = vmatprep.mubr.bf16.mxu0 %v294
    %1604 = vmatmul.mubr.bf16.gmra.mxu0 %v293
    %v1605 = vpop.f32.mrf.mxu0
    %v1606 = vadd.f32 %v1565, %v1605
    %v1607 = vpop.f32.mrf.mxu0
    %v1608 = vpop.f32.mrf.mxu0
    %v1609 = vadd.f32 %v1568, %v1608
    %v1610 = vpop.f32.mrf.mxu0
    %1611 = vdwg.mxu0
    %1612 = vmatprep.subr.bf16.mxu0 0
    %1613 = vmatpush1.bf16.msra.mxu0 %v1416
    %1614 = vmatprep.subr.bf16.mxu0 0
    %1615 = vmatpush1.bf16.msra.mxu0 %v1415
    %1616 = vmatprep.subr.bf16.mxu0 0
    %1617 = vmatpush1.bf16.msra.mxu0 %v1414
    %1618 = vmatprep.subr.bf16.mxu0 0
    %1619 = vmatpush1.bf16.msra.mxu0 %v1413
    %1620 = vmatprep.subr.bf16.mxu0 0
    %1621 = vmatpush1.bf16.msra.mxu0 %v1412
    %1622 = vmatprep.subr.bf16.mxu0 0
    %1623 = vmatpush1.bf16.msra.mxu0 %v1411
    %1624 = vmatprep.subr.bf16.mxu0 0
    %1625 = vmatpush1.bf16.msra.mxu0 %v1410
    %1626 = vmatprep.subr.bf16.mxu0 0
    %1627 = vmatpush1.bf16.msra.mxu0 %v1409
    %1628 = vmatprep.subr.bf16.mxu0 0
    %1629 = vmatpush2.bf16.msra.mxu0 %v1424
    %1630 = vmatprep.subr.bf16.mxu0 0
    %1631 = vmatpush2.bf16.msra.mxu0 %v1423
    %1632 = vmatprep.subr.bf16.mxu0 0
    %1633 = vmatpush2.bf16.msra.mxu0 %v1422
    %1634 = vmatprep.subr.bf16.mxu0 0
    %1635 = vmatpush2.bf16.msra.mxu0 %v1421
    %1636 = vmatprep.subr.bf16.mxu0 0
    %1637 = vmatpush2.bf16.msra.mxu0 %v1420
    %1638 = vmatprep.subr.bf16.mxu0 0
    %1639 = vmatpush2.bf16.msra.mxu0 %v1419
    %1640 = vmatprep.subr.bf16.mxu0 0
    %1641 = vmatpush2.bf16.msra.mxu0 %v1418
    %1642 = vmatprep.subr.bf16.mxu0 0
    %1643 = vmatpush2.bf16.msra.mxu0 %v1417
    %1644 = vmatprep.mubr.bf16.mxu0 %v296
    %1645 = vmatmul.mubr.bf16.gmra.mxu0 %v295
    %v1646 = vpop.f32.mrf.mxu0
    %v1647 = vadd.f32 %v1606, %v1646
    %v1648 = vpop.f32.mrf.mxu0
    %v1649 = vpop.f32.mrf.mxu0
    %v1650 = vadd.f32 %v1609, %v1649
    %v1651 = vpop.f32.mrf.mxu0
    %1652 = vdwg.mxu0
    %v1653 = vmax.f32 %v1647, 0.0
    %v1654 = vmax.f32 %v1650, 0.0
    %v1655 = vpack.c.bf16 %v1654, %v1653
    %v1656 = vld [vmem:[#allocation13] sm:$0xf]
    %v1657 = vld [vmem:[#allocation13 + $0x4] sm:$0xf]
    %v1658 = vld [vmem:[#allocation13 + $0x8] sm:$0xf]
    %v1659 = vld [vmem:[#allocation13 + $0xc] sm:$0xf]
    %v1660 = vld [vmem:[#allocation13 + $0x10] sm:$0xf]
    %v1661 = vld [vmem:[#allocation13 + $0x14] sm:$0xf]
    %v1662 = vld [vmem:[#allocation13 + $0x18] sm:$0xf]
    %v1663 = vld [vmem:[#allocation13 + $0x1c] sm:$0xf]
    %v1664 = vld [vmem:[#allocation13 + $0x20] sm:$0xf]
    %v1665 = vld [vmem:[#allocation13 + $0x24] sm:$0xf]
    %v1666 = vld [vmem:[#allocation13 + $0x28] sm:$0xf]
    %v1667 = vld [vmem:[#allocation13 + $0x2c] sm:$0xf]
    %v1668 = vld [vmem:[#allocation13 + $0x30] sm:$0xf]
    %v1669 = vld [vmem:[#allocation13 + $0x34] sm:$0xf]
    %v1670 = vld [vmem:[#allocation13 + $0x38] sm:$0xf]
    %v1671 = vld [vmem:[#allocation13 + $0x3c] sm:$0xf]
    %v1672 = vld [vmem:[%s9] sm:$0x1]
    %v1674 = vlaneseq
    %v1675 = vshrl.u32 %v1674, 7
    %v1676 = vsub.s32 0, %v1675
    %v1677 = vrot.slane %v1672, %v1676
    %v1695 = vunpack.c.l.b16 %v1656
    %v1696 = vunpack.c.l.b16 %v1657
    %v1697 = vunpack.c.l.b16 %v1658
    %v1698 = vunpack.c.l.b16 %v1659
    %v1699 = vunpack.c.l.b16 %v1660
    %v1700 = vunpack.c.l.b16 %v1661
    %v1701 = vunpack.c.l.b16 %v1662
    %v1702 = vunpack.c.l.b16 %v1663
    %v1703 = vunpack.c.l.b16 %v1664
    %v1704 = vunpack.c.l.b16 %v1665
    %v1705 = vunpack.c.l.b16 %v1666
    %v1706 = vunpack.c.l.b16 %v1667
    %v1707 = vunpack.c.l.b16 %v1668
    %v1708 = vunpack.c.l.b16 %v1669
    %v1709 = vunpack.c.l.b16 %v1670
    %v1710 = vunpack.c.l.b16 %v1671
    %v1711 = vpack.c.b16 %v1696, %v1695
    %v1712 = vpack.c.b16 %v1698, %v1697
    %v1713 = vpack.c.b16 %v1700, %v1699
    %v1714 = vpack.c.b16 %v1702, %v1701
    %v1715 = vpack.c.b16 %v1704, %v1703
    %v1716 = vpack.c.b16 %v1706, %v1705
    %v1717 = vpack.c.b16 %v1708, %v1707
    %v1718 = vpack.c.b16 %v1710, %v1709
    %1727 = vmatprep.subr.bf16.mxu0 0
    %1728 = vmatpush1.bf16.msra.mxu0 %v1718
    %1729 = vmatprep.subr.bf16.mxu0 0
    %1730 = vmatpush1.bf16.msra.mxu0 %v1717
    %1731 = vmatprep.subr.bf16.mxu0 0
    %1732 = vmatpush1.bf16.msra.mxu0 %v1716
    %1733 = vmatprep.subr.bf16.mxu0 0
    %1734 = vmatpush1.bf16.msra.mxu0 %v1715
    %1735 = vmatprep.subr.bf16.mxu0 0
    %1736 = vmatpush1.bf16.msra.mxu0 %v1714
    %1737 = vmatprep.subr.bf16.mxu0 0
    %1738 = vmatpush1.bf16.msra.mxu0 %v1713
    %1739 = vmatprep.subr.bf16.mxu0 0
    %1740 = vmatpush1.bf16.msra.mxu0 %v1712
    %1741 = vmatprep.subr.bf16.mxu0 0
    %1742 = vmatpush1.bf16.msra.mxu0 %v1711
    %1743 = vmatprep.subr.bf16.mxu0 0
    %1744 = vmatpush2.bf16.msra.mxu0 0
    %1745 = vmatprep.subr.bf16.mxu0 0
    %1746 = vmatpush2.bf16.msra.mxu0 0
    %1747 = vmatprep.subr.bf16.mxu0 0
    %1748 = vmatpush2.bf16.msra.mxu0 0
    %1749 = vmatprep.subr.bf16.mxu0 0
    %1750 = vmatpush2.bf16.msra.mxu0 0
    %1751 = vmatprep.subr.bf16.mxu0 0
    %1752 = vmatpush2.bf16.msra.mxu0 0
    %1753 = vmatprep.subr.bf16.mxu0 0
    %1754 = vmatpush2.bf16.msra.mxu0 0
    %1755 = vmatprep.subr.bf16.mxu0 0
    %1756 = vmatpush2.bf16.msra.mxu0 0
    %1757 = vmatprep.subr.bf16.mxu0 0
    %1758 = vmatpush2.bf16.msra.mxu0 0
    %1759 = vmatprep.mubr.bf16.mxu0 0
    %1760 = vmatmul.mubr.bf16.gmra.mxu0 %v1655
    %v1761 = vpop.f32.mrf.mxu0
    %v1762 = vpop.f32.mrf.mxu0
    %v1763 = vpop.f32.mrf.mxu0
    %v1764 = vadd.f32 %v1677, %v1763
    %v1765 = vpop.f32.mrf.mxu0
    %1766 = vdwg.mxu0
    %v1767 = vlaneseq
    %v1768 = vand.u32 %v1767, 127
    %vm1769 = vcmp.lt.s32.totalorder %v1768, 10
    %v1770 = vsel %vm1769, %v962, -1e+30
    %1771 = vmax.xlane.f32.xlu0 %v1770
    %v1772 = vpop.xlane.xlu0 %1771
    %v1773 = vsub.f32 %v962, %v1772
    %v1774 = vmul.f32 %v1773, 1.442695
    %v1775 = vpow.pop %v1774
    %v1776 = vsel %vm1769, %v1775, 0.0
    %1777 = vadd.xlane.f32.xlu0 %v1776
    %v1778 = vpop.xlane.xlu0 %1777
    %v1779 = vlog2.pop %v1778
    %v1780 = vmul.f32 %v1779, 0.6931472
    %v1781 = vsub.f32 %v1773, %v1780
    %v1782 = vlaneseq
    %v1783 = vshrl.u32 %v1782, 7
    %s1784 = sld [smem:[#allocation2]]
    %vm1785 = vcmp.eq.s32.totalorder %v1783, 0
    %v1786 = vstv %s1784
    %vm1787 = vcmp.eq.s32.totalorder %v1768, %v1786
    %vm1788 = vmand %vm1785, %vm1787
    %v1789 = vsel %vm1788, 1.0, 0.0
    %v1790 = vadd.f32 %v1789, 0.0
    %s1791 = sld [smem:[#allocation2 + $0x1]]
    %vm1792 = vcmp.eq.s32.totalorder %v1783, 1
    %v1793 = vstv %s1791
    %vm1794 = vcmp.eq.s32.totalorder %v1768, %v1793
    %vm1795 = vmand %vm1792, %vm1794
    %v1796 = vsel %vm1795, 1.0, 0.0
    %v1797 = vadd.f32 %v1790, %v1796
    %v1798 = vmul.f32 %v1797, %v1781
    %1799 = vadd.xlane.f32.xlu0 %v1798
    %v1800 = vpop.xlane.xlu0 %1799
    %v1801 = vrot.slane %v1800, 4
    %v1802 = vadd.f32 %v1800, %v1801
    %v1803 = vrot.slane %v1802, 2
    %v1804 = vadd.f32 %v1802, %v1803
    %v1805 = vrot.slane %v1804, 1
    %v1806 = vadd.f32 %v1804, %v1805
    %s1807 = vtos %v1806
    %s1808 = ssub.f32 0.0, %s1807
    %s1809 = smul.f32 %s1808, 0.5
    %s1810 = smul.f32 %s1809, 0.3
    %v1811 = vmul.f32 %v1764, 2.0
    %v1812 = vsel %vm1769, %v1811, -1e+30
    %1813 = vmax.xlane.f32.xlu0 %v1812
    %v1814 = vpop.xlane.xlu0 %1813
    %v1815 = vsub.f32 %v1811, %v1814
    %v1816 = vmul.f32 %v1815, 1.442695
    %v1817 = vpow.pop %v1816
    %v1818 = vsel %vm1769, %v1817, 0.0
    %1819 = vadd.xlane.f32.xlu0 %v1818
    %v1820 = vpop.xlane.xlu0 %1819
    %v1821 = vrcp.pop %v1820
    %v1822 = vmul.f32 %v1818, %v1821
    %v1823 = vmul.f32 %v965, 2.0
    %v1824 = vsel %vm1769, %v1823, -1e+30
    %1825 = vmax.xlane.f32.xlu0 %v1824
    %v1826 = vpop.xlane.xlu0 %1825
    %v1827 = vsub.f32 %v1823, %v1826
    %v1828 = vmul.f32 %v1827, 1.442695
    %v1829 = vpow.pop %v1828
    %v1830 = vsel %vm1769, %v1829, 0.0
    %1831 = vadd.xlane.f32.xlu0 %v1830
    %v1832 = vpop.xlane.xlu0 %1831
    %v1833 = vlog2.pop %v1832
    %v1834 = vmul.f32 %v1833, 0.6931472
    %v1835 = vmul.f32 %v1822, %v1827
    %1836 = vadd.xlane.f32.xlu0 %v1835
    %v1837 = vpop.xlane.xlu0 %1836
    %v1838 = vsub.f32 %v1834, %v1837
    %vm1839 = vcmp.lt.s32.totalorder %v1783, 4
    %v1840 = vsel %vm1839, %v1838, 0.0
    %vm1841 = vcmask 7168
    %v1842 = vsel %vm1841, %v1840, 0.0
    %1843 = vadd.xlane.f32.xlu0 %v1842
    %v1844 = vpop.xlane.xlu0 %1843
    %v1845 = vrot.slane %v1844, 4
    %v1846 = vadd.f32 %v1844, %v1845
    %v1847 = vrot.slane %v1846, 2
    %v1848 = vadd.f32 %v1846, %v1847
    %v1849 = vrot.slane %v1848, 1
    %v1850 = vadd.f32 %v1848, %v1849
    %s1851 = vtos %v1850
    %s1852 = smul.f32 %s1851, 0.25
    %s1853 = smul.f32 %s1852, 0.7
    %s1854 = sadd.f32 %s1810, %s1853
    %s1855 = scalar_lea.smem [#allocation15], 0
    %1856 = sst [smem:[%s1855]] %s1854
    %s1857 = scalar_lea.smem [#allocation16], 0
    %1858 = sst [smem:[%s1857]] %s1810
    %s1859 = scalar_lea.smem [#allocation18], 0
    %1860 = sst [smem:[%s1859]] %s1853
    // Predicated region
    $region66: #{tpu_custom_call.1} parent=1 // pred_check
      _
    $region67: #{tpu_custom_call.1} parent=1 // pred_check_branch
      %1862 = sbr.rel (0) target = $region69
    $region68: #{tpu_custom_call.1} parent=1 // pred_region
      %s1864 = ssub.s32 256, 256
      %1865 = vsyncadd [#allocation4], %s1864
      %s1866 = sshll.u32 [#allocation14], 4
      %s1867 = int_to_ptr.vmem [resolvable:$true] %s1866
      %1872 = dma.vmem_to_hbm [thread:$0]  %s1867, 256, %s10, [#allocation4], 128, 128, 8
    $region69: #{tpu_custom_call.1} parent=1 // pred_fallthru
      _
    // Predicated region
    $region70: #{tpu_custom_call.1} parent=1 // pred_check
      _
    $region71: #{tpu_custom_call.1} parent=1 // pred_check_branch
      %1874 = sbr.rel (0) target = $region73
    $region72: #{tpu_custom_call.1} parent=1 // pred_region
      %s1876 = ssub.s32 16, 16
      %1877 = vsyncadd [#allocation6], %s1876
      %1880 = dma.smem_to_hbm [#allocation15], 16, %s11, [#allocation6]
    $region73: #{tpu_custom_call.1} parent=1 // pred_fallthru
      _
    // Predicated region
    $region74: #{tpu_custom_call.1} parent=1 // pred_check
      _
    $region75: #{tpu_custom_call.1} parent=1 // pred_check_branch
      %1882 = sbr.rel (0) target = $region77
    $region76: #{tpu_custom_call.1} parent=1 // pred_region
      %s1884 = ssub.s32 16, 16
      %1885 = vsyncadd [#allocation17], %s1884
      %1888 = dma.smem_to_hbm [#allocation16], 16, %s12, [#allocation17]
    $region77: #{tpu_custom_call.1} parent=1 // pred_fallthru
      _
    // Predicated region
    $region78: #{tpu_custom_call.1} parent=1 // pred_check
      _
    $region79: #{tpu_custom_call.1} parent=1 // pred_check_branch
      %1890 = sbr.rel (0) target = $region81
    $region80: #{tpu_custom_call.1} parent=1 // pred_region
      %s1892 = ssub.s32 16, 16
      %1893 = vsyncadd [#allocation17], %s1892
      %1896 = dma.smem_to_hbm [#allocation18], 16, %s13, [#allocation17]
    $region81: #{tpu_custom_call.1} parent=1 // pred_fallthru
      _
    // Predicated region
    $region82: #{tpu_custom_call.1} parent=1 // pred_check
      _
    $region83: #{tpu_custom_call.1} parent=1 // pred_check_branch
      %1898 = sbr.rel (0) target = $region85
    $region84: #{tpu_custom_call.1} parent=1 // pred_region
      %1899 = dma.done [#allocation4], 256
    $region85: #{tpu_custom_call.1} parent=1 // pred_fallthru
      _
    // Predicated region
    $region86: #{tpu_custom_call.1} parent=1 // pred_check
      _
    $region87: #{tpu_custom_call.1} parent=1 // pred_check_branch
      %1901 = sbr.rel (0) target = $region89
    $region88: #{tpu_custom_call.1} parent=1 // pred_region
      %1902 = dma.done [#allocation6], 16
    $region89: #{tpu_custom_call.1} parent=1 // pred_fallthru
      _
    // Predicated region
    $region90: #{tpu_custom_call.1} parent=1 // pred_check
      _
    $region91: #{tpu_custom_call.1} parent=1 // pred_check_branch
      %1904 = sbr.rel (0) target = $region93
    $region92: #{tpu_custom_call.1} parent=1 // pred_region
      %1905 = dma.done [#allocation17], 16
    $region93: #{tpu_custom_call.1} parent=1 // pred_fallthru
      _
    // Predicated region
    $region94: #{tpu_custom_call.1} parent=1 // pred_check
      _
    $region95: #{tpu_custom_call.1} parent=1 // pred_check_branch
      %1907 = sbr.rel (0) target = $region97
    $region96: #{tpu_custom_call.1} parent=1 // pred_region
      %1908 = dma.done [#allocation17], 16
    $region97: #{tpu_custom_call.1} parent=1 // pred_fallthru
      _
    %1909 = sfence
    %1910 = vsyncpa [#allocation3], 1
    %1911 = vsyncpa [#allocation9], 1
    %1912 = vsyncpa [#allocation12], 1
    %1913 = vsyncpa [#allocation4], 1
    %1914 = vsyncpa [#allocation5], 1
    %1915 = vsyncpa [#allocation6], 1
    %1916 = vsyncpa [#allocation17], 1

</llo_original>
